<compile_context>
chip_gen: v7x
topology: tpu7x:2x2x1
jax: 0.10.0
libtpu: 0.0.40
codegen_flags: <defaults>
</compile_context>

<pallas_src>
import jax
import jax.numpy as jnp
from jax.experimental import pallas as pl
from jax.experimental.pallas import tpu as pltpu

EPS = 1e-6          # utils.basic.reduce_masked_mean epsilon
POS_WEIGHT = 2.13   # SimpleLoss pos_weight

# rows of the per-batch partial-sum accumulator / output tile
ROW_INTER, ROW_UNION = 0, 1
ROW_CE_NUM, ROW_CE_DEN = 2, 3
ROW_POS_NUM, ROW_POS_DEN = 4, 5
ROW_NEG_NUM, ROW_NEG_DEN = 6, 7
ROW_OFF_NUM, ROW_OFF_DEN = 8, 9
N_ROWS = 10
N_ROWS_PAD = 16      # sublane-aligned row count for the accumulator / output
OUT_LANES = 128      # lane-dense (unmasked) output stores

_TEMP_F32_PLANES = 16  # conservative count of live per-pixel f32 temporaries


def _bev_loss_kernel(seg_e_ref, seg_g_ref, valid_ref,
                     cen_e_ref, cen_g_ref,
                     off_e_ref, off_g_ref, out_ref, acc_ref):
    zi = pl.program_id(1)

    @pl.when(zi == 0)
    def _():
        acc_ref[...] = jnp.zeros_like(acc_ref)

    f32 = jnp.float32
    seg_e = seg_e_ref[...].astype(f32)      # (BT, TZ, X) logits
    seg_g = seg_g_ref[...].astype(f32)      # bf16 -> f32 after the load
    valid = valid_ref[...].astype(f32)
    cen_e = cen_e_ref[...].astype(f32)
    cen_g = cen_g_ref[...].astype(f32)
    off_e = off_e_ref[...].astype(f32)      # (BT, 2, TZ, X)
    off_g = off_g_ref[...].astype(f32)

    def zsum(x):                            # sublane-only reduce -> (BT, 1, X)
        return jnp.sum(x, axis=1, keepdims=True)

    def acc(row, x):                        # accumulate one partial-sum row
        acc_ref[:, row:row + 1, :] += zsum(x)

    # torch.sigmoid(x).round() == (x > 0)
    seg_round = (seg_e > 0.0).astype(f32)
    sg_valid = seg_g * valid

    acc(ROW_INTER, seg_round * sg_valid)
    # exact torch form: clamp((round + gt) * valid, 0, 1) (valid may be fractional)
    acc(ROW_UNION, jnp.clip((seg_round + seg_g) * valid, 0.0, 1.0))

    # BCEWithLogits(pos_weight=p), reduction='none':
    #   sp*(1 + (p-1)*y) - p*y*x   with sp = softplus(x)  (EUP exp/log -> free slot)
    sp = jnp.maximum(seg_e, 0.0) + jnp.log1p(jnp.exp(-jnp.abs(seg_e)))
    bce = sp * (1.0 + (POS_WEIGHT - 1.0) * seg_g) - POS_WEIGHT * seg_g * seg_e
    acc(ROW_CE_NUM, bce * valid)
    acc(ROW_CE_DEN, valid)

    # balanced_mse partial sums
    mse = (cen_e - cen_g) ** 2
    pos_mask = (cen_g > 0.5).astype(f32)
    neg_mask = (cen_g < 0.5).astype(f32)
    acc(ROW_POS_NUM, mse * pos_mask)
    acc(ROW_POS_DEN, pos_mask)
    acc(ROW_NEG_NUM, mse * neg_mask)
    acc(ROW_NEG_DEN, neg_mask)

    # offset L1 over the channel dim, masked by seg_g * valid
    off_l1 = (jnp.abs(off_e[:, 0] - off_g[:, 0])
              + jnp.abs(off_e[:, 1] - off_g[:, 1]))
    acc(ROW_OFF_NUM, off_l1 * sg_valid)
    acc(ROW_OFF_DEN, sg_valid)

    @pl.when(zi == pl.num_programs(1) - 1)
    def _():
        # Finish the cross-lane (X) reduction in-kernel (XLU is otherwise idle)
        # and lane-broadcast into the 128-lane output tile so the store is
        # unmasked; the JAX epilogue reads lane 0.
        totals = jnp.sum(acc_ref[...], axis=-1, keepdims=True)   # (BT, 16, 1)
        out_ref[...] = jnp.broadcast_to(totals, out_ref.shape)


def _choose_tiles(B, Z, X, in_bytes_per_pixel, *,
                  target_steps=8,            # >= 4 per TensorCore on dual-core chips
                  min_step_bytes=192 << 10,  # amortize the ~0.35us per-step overhead
                  vmem_budget=12 << 20):
    """Pick (batch_block, z_strip) for the grid.

    Batch block stays at 1: at BEV resolution a single (Z-strip, X) tile is
    already large enough to amortize the per-step cost and it keeps the
    per-core working set small for v7x (64 MiB VMEM, 2 TensorCores).  The z
    axis is strip-mined (multiples of 8 sublanes, or the full Z) so the grid
    has at least `target_steps` steps whenever that does not shrink per-step
    DMA below `min_step_bytes` or overflow the scoped-VMEM budget.
    """
    bt = 1
    cands = sorted({Z} | {tz for tz in range(8, Z, 8) if Z % tz == 0})

    def step_in_bytes(tz):
        return bt * tz * X * in_bytes_per_pixel

    def step_vmem_bytes(tz):
        return (2 * step_in_bytes(tz)                       # double-buffered inputs
                + _TEMP_F32_PLANES * bt * tz * X * 4        # in-kernel f32 temporaries
                + bt * N_ROWS_PAD * X * 4                   # row accumulator
                + 2 * bt * N_ROWS_PAD * OUT_LANES * 4)      # double-buffered output

    fits = [tz for tz in cands if step_vmem_bytes(tz) <= vmem_budget] or cands[:1]
    good = [tz for tz in fits
            if B * (Z // tz) >= target_steps and step_in_bytes(tz) >= min_step_bytes]
    if good:
        tz = max(good)                  # fewest steps that still hit the step target
    else:
        sized = [tz for tz in fits if step_in_bytes(tz) >= min_step_bytes]
        tz = min(sized) if sized else max(fits)   # favour step size over step count
    return bt, tz


def simplebev_forward(seg_bev_e, seg_bev_g, valid_bev_g,
                      center_bev_e, center_bev_g,
                      offset_bev_e, offset_bev_g,
                      ce_weight, center_weight, offset_weight):
    """Replicates SimpleBEV.forward loss/IoU computation.

    Single-channel maps are (B, 1, Z, X); offsets are (B, 2, Z, X).  Any plane
    may be bf16 (casts to f32 happen in-kernel after the load).
    """
    seg_e = jnp.squeeze(seg_bev_e, 1)
    seg_g = jnp.squeeze(seg_bev_g, 1)
    valid = jnp.squeeze(valid_bev_g, 1)
    cen_e = jnp.squeeze(center_bev_e, 1)
    cen_g = jnp.squeeze(center_bev_g, 1)
    off_e = offset_bev_e
    off_g = offset_bev_g

    B, Z, X = seg_e.shape
    bytes_per_pixel = (seg_e.dtype.itemsize + seg_g.dtype.itemsize
                       + valid.dtype.itemsize + cen_e.dtype.itemsize
                       + cen_g.dtype.itemsize
                       + 2 * off_e.dtype.itemsize + 2 * off_g.dtype.itemsize)
    BT, TZ = _choose_tiles(B, Z, X, bytes_per_pixel)

    # Blocks use aligned Z strips (or the full Z) and the full X extent; X need
    # not be a multiple of 128 when the block equals the array dim.
    map_spec = pl.BlockSpec((BT, TZ, X), lambda b, z: (b, z, 0))
    off_spec = pl.BlockSpec((BT, 2, TZ, X), lambda b, z: (b, 0, z, 0))
    out_spec = pl.BlockSpec((BT, N_ROWS_PAD, OUT_LANES), lambda b, z: (b, 0, 0))

    vmem_est = (2 * BT * TZ * X * bytes_per_pixel
                + _TEMP_F32_PLANES * BT * TZ * X * 4
                + BT * N_ROWS_PAD * X * 4
                + 2 * BT * N_ROWS_PAD * OUT_LANES * 4)
    vmem_limit = int(min(max(3 * vmem_est, 32 << 20), 48 << 20))

    sums = pl.pallas_call(
        _bev_loss_kernel,
        grid=(B // BT, Z // TZ),
        in_specs=[map_spec, map_spec, map_spec, map_spec, map_spec,
                  off_spec, off_spec],
        out_specs=out_spec,
        out_shape=jax.ShapeDtypeStruct((B, N_ROWS_PAD, OUT_LANES), jnp.float32),
        scratch_shapes=[pltpu.VMEM((BT, N_ROWS_PAD, X), jnp.float32)],
        compiler_params=pltpu.CompilerParams(
            dimension_semantics=("parallel", "arbitrary"),
            vmem_limit_bytes=vmem_limit),
    )(seg_e, seg_g, valid, cen_e, cen_g, off_e, off_g)

    s = sums[:, :, 0]                    # (B, N_ROWS_PAD); lane 0 holds the totals

    intersection = s[:, ROW_INTER]
    union = s[:, ROW_UNION]
    iou = jnp.mean(intersection / (1e-4 + union))

    ce_loss = jnp.sum(s[:, ROW_CE_NUM]) / (EPS + jnp.sum(s[:, ROW_CE_DEN]))
    pos_loss = jnp.sum(s[:, ROW_POS_NUM]) / (EPS + jnp.sum(s[:, ROW_POS_DEN]))
    neg_loss = jnp.sum(s[:, ROW_NEG_NUM]) / (EPS + jnp.sum(s[:, ROW_NEG_DEN]))
    center_loss = 0.5 * (pos_loss + neg_loss)
    offset_loss = jnp.sum(s[:, ROW_OFF_NUM]) / (EPS + jnp.sum(s[:, ROW_OFF_DEN]))

    ce_factor = 1.0 / jnp.exp(ce_weight)
    ce_loss = 10.0 * ce_loss * ce_factor
    ce_uncertainty_loss = 0.5 * ce_weight
    center_factor = 1.0 / (2.0 * jnp.exp(center_weight))
    center_loss = center_factor * center_loss
    center_uncertainty_loss = 0.5 * center_weight
    offset_factor = 1.0 / (2.0 * jnp.exp(offset_weight))
    offset_loss = offset_factor * offset_loss
    offset_uncertainty_loss = 0.5 * offset_weight

    total_loss = (ce_loss + center_loss + offset_loss
                  + ce_uncertainty_loss + center_uncertainty_loss
                  + offset_uncertainty_loss)

    return {
        'total_loss': total_loss,
        'loss_details': {
            'ce': ce_loss, 'center': center_loss, 'offset': offset_loss,
            'ce_uncertainty': ce_uncertainty_loss,
            'center_uncertainty': center_uncertainty_loss,
            'offset_uncertainty': offset_uncertainty_loss,
        },
        'iou': iou,
        'intersection': intersection,
        'union': union,
    }


def _reference(seg_e4, seg_g4, valid4, cen_e4, cen_g4, off_e, off_g,
               ce_w, cen_w, off_w):
    """Pure-JAX reference with the original torch formulations (for checking)."""
    f32 = jnp.float32
    seg_e = jnp.squeeze(seg_e4, 1).astype(f32)
    seg_g = jnp.squeeze(seg_g4, 1).astype(f32)
    valid = jnp.squeeze(valid4, 1).astype(f32)
    cen_e = jnp.squeeze(cen_e4, 1).astype(f32)
    cen_g = jnp.squeeze(cen_g4, 1).astype(f32)
    off_e = off_e.astype(f32)
    off_g = off_g.astype(f32)

    sig_round = (seg_e > 0.0).astype(f32)
    inter = jnp.sum(sig_round * seg_g * valid, axis=(1, 2))
    union = jnp.sum(jnp.clip((sig_round + seg_g) * valid, 0.0, 1.0), axis=(1, 2))
    iou = jnp.mean(inter / (1e-4 + union))

    def rmm(x, m):
        return jnp.sum(x * m) / (EPS + jnp.sum(m))

    sp = jnp.maximum(seg_e, 0.0) + jnp.log1p(jnp.exp(-jnp.abs(seg_e)))
    bce = POS_WEIGHT * seg_g * (sp - seg_e) + (1.0 - seg_g) * sp
    ce = rmm(bce, valid)
    mse = (cen_e - cen_g) ** 2
    center = 0.5 * (rmm(mse, (cen_g > 0.5).astype(f32))
                    + rmm(mse, (cen_g < 0.5).astype(f32)))
    off_l1 = jnp.sum(jnp.abs(off_e - off_g), axis=1)
    off = rmm(off_l1, seg_g * valid)
    ce = 10.0 * ce / jnp.exp(ce_w)
    center = center / (2.0 * jnp.exp(cen_w))
    off = off / (2.0 * jnp.exp(off_w))
    total = ce + center + off + 0.5 * (ce_w + cen_w + off_w)
    return total, iou, inter, union


def _run_case(key, B, Z, X):
    k = jax.random.split(key, 7)
    # predictions stay f32 (backbone logits / regressions); binary GT masks in
    # bf16 (exact), regression GT kept f32 to match an f32-GT torch baseline
    seg_bev_e = jax.random.normal(k[0], (B, 1, Z, X), jnp.float32)
    seg_bev_g = (jax.random.uniform(k[1], (B, 1, Z, X)) > 0.7).astype(jnp.bfloat16)
    valid_bev_g = (jax.random.uniform(k[2], (B, 1, Z, X)) > 0.1).astype(jnp.bfloat16)
    center_bev_e = jax.random.uniform(k[3], (B, 1, Z, X), jnp.float32)
    center_bev_g = jax.random.uniform(k[4], (B, 1, Z, X), jnp.float32)
    offset_bev_e = jax.random.normal(k[5], (B, 2, Z, X), jnp.float32)
    offset_bev_g = jax.random.normal(k[6], (B, 2, Z, X), jnp.float32)

    # Segnet uncertainty parameters, deterministic init (nn.Parameter(0.0))
    ce_w = jnp.float32(0.0)
    cen_w = jnp.float32(0.0)
    off_w = jnp.float32(0.0)

    out = simplebev_forward(seg_bev_e, seg_bev_g, valid_bev_g,
                            center_bev_e, center_bev_g,
                            offset_bev_e, offset_bev_g, ce_w, cen_w, off_w)
    out = jax.block_until_ready(out)

    ref_total, ref_iou, ref_inter, ref_union = _reference(
        seg_bev_e, seg_bev_g, valid_bev_g, center_bev_e, center_bev_g,
        offset_bev_e, offset_bev_g, ce_w, cen_w, off_w)

    assert jnp.allclose(out['total_loss'], ref_total, rtol=1e-4, atol=1e-4), \
        (out['total_loss'], ref_total)
    assert jnp.allclose(out['iou'], ref_iou, rtol=1e-4, atol=1e-4), \
        (out['iou'], ref_iou)
    assert jnp.allclose(out['intersection'], ref_inter, rtol=1e-4, atol=1e-2)
    assert jnp.allclose(out['union'], ref_union, rtol=1e-4, atol=1e-2)


if __name__ == "__main__":
    key = jax.random.PRNGKey(0)
    k1, k2 = jax.random.split(key)
    # small BEV grids (model uses Z=X=200); X=200 exercises the unaligned lane
    # tail, Z=64 exercises the z-strip accumulation path (multiple z steps)
    _run_case(k1, B=2, Z=16, X=200)   # single z step per batch block
    _run_case(k2, B=2, Z=64, X=200)   # multiple z steps, accumulator path
    print("KERNEL_OK")
</pallas_src>

<mosaic_0001>
module attributes {stable_mosaic.version = 11 : i64} {
  func.func @_bev_loss_kernel(%arg0: i32, %arg1: i32, %arg2: memref<1x16x200xf32, #tpu.memory_space<vmem>>, %arg3: memref<1x16x200xbf16, #tpu.memory_space<vmem>>, %arg4: memref<1x16x200xbf16, #tpu.memory_space<vmem>>, %arg5: memref<1x16x200xf32, #tpu.memory_space<vmem>>, %arg6: memref<1x16x200xf32, #tpu.memory_space<vmem>>, %arg7: memref<1x2x16x200xf32, #tpu.memory_space<vmem>>, %arg8: memref<1x2x16x200xf32, #tpu.memory_space<vmem>>, %arg9: memref<1x16x128xf32, #tpu.memory_space<vmem>>, %arg10: memref<1x16x200xf32, #tpu.memory_space<vmem>>) attributes {dimension_semantics = [#tpu.dimension_semantics<parallel>, #tpu.dimension_semantics<arbitrary>], iteration_bounds = array<i64: 2, 1>, scalar_prefetch = 0 : i64, scratch_operands = 1 : i64, tpu.core_type = #tpu.core_type<tc>, window_params = [{transform_indices = @transform_0, window_bounds = array<i64: 1, 16, 200>}, {transform_indices = @transform_1, window_bounds = array<i64: 1, 16, 200>}, {transform_indices = @transform_2, window_bounds = array<i64: 1, 16, 200>}, {transform_indices = @transform_3, window_bounds = array<i64: 1, 16, 200>}, {transform_indices = @transform_4, window_bounds = array<i64: 1, 16, 200>}, {transform_indices = @transform_5, window_bounds = array<i64: 1, 2, 16, 200>}, {transform_indices = @transform_6, window_bounds = array<i64: 1, 2, 16, 200>}, {transform_indices = @transform_7, window_bounds = array<i64: 1, 16, 128>}]} {
    %c0_i32 = arith.constant 0 : i32
    %0 = arith.cmpi eq, %arg1, %c0_i32 : i32
    %1 = arith.extui %0 : i1 to i32
    %c0_i32_0 = arith.constant 0 : i32
    %2 = arith.cmpi ne, %1, %c0_i32_0 : i32
    scf.if %2 {
      %cst_95 = arith.constant 0.000000e+00 : f32
      %121 = vector.broadcast %cst_95 : f32 to vector<1x16x200xf32>
      %c0_96 = arith.constant 0 : index
      %c0_97 = arith.constant 0 : index
      %c0_98 = arith.constant 0 : index
      %122 = vector.load %arg10[%c0_96, %c0_97, %c0_98] : memref<1x16x200xf32, #tpu.memory_space<vmem>>, vector<1x16x200xf32>
      tpu.vector_store %arg10[%c0_96, %c0_97, %c0_98], %121 {strides = array<i32>} : memref<1x16x200xf32, #tpu.memory_space<vmem>>, vector<1x16x200xf32>,
    } else {
    }
    %c0 = arith.constant 0 : index
    %c0_1 = arith.constant 0 : index
    %c0_2 = arith.constant 0 : index
    %3 = vector.load %arg2[%c0, %c0_1, %c0_2] : memref<1x16x200xf32, #tpu.memory_space<vmem>>, vector<1x16x200xf32>
    %c0_3 = arith.constant 0 : index
    %c0_4 = arith.constant 0 : index
    %c0_5 = arith.constant 0 : index
    %4 = vector.load %arg3[%c0_3, %c0_4, %c0_5] : memref<1x16x200xbf16, #tpu.memory_space<vmem>>, vector<1x16x200xbf16>
    %5 = arith.extf %4 : vector<1x16x200xbf16> to vector<1x16x200xf32>
    %c0_6 = arith.constant 0 : index
    %c0_7 = arith.constant 0 : index
    %c0_8 = arith.constant 0 : index
    %6 = vector.load %arg4[%c0_6, %c0_7, %c0_8] : memref<1x16x200xbf16, #tpu.memory_space<vmem>>, vector<1x16x200xbf16>
    %7 = arith.extf %6 : vector<1x16x200xbf16> to vector<1x16x200xf32>
    %c0_9 = arith.constant 0 : index
    %c0_10 = arith.constant 0 : index
    %c0_11 = arith.constant 0 : index
    %8 = vector.load %arg5[%c0_9, %c0_10, %c0_11] : memref<1x16x200xf32, #tpu.memory_space<vmem>>, vector<1x16x200xf32>
    %c0_12 = arith.constant 0 : index
    %c0_13 = arith.constant 0 : index
    %c0_14 = arith.constant 0 : index
    %9 = vector.load %arg6[%c0_12, %c0_13, %c0_14] : memref<1x16x200xf32, #tpu.memory_space<vmem>>, vector<1x16x200xf32>
    %c0_15 = arith.constant 0 : index
    %c0_16 = arith.constant 0 : index
    %c0_17 = arith.constant 0 : index
    %c0_18 = arith.constant 0 : index
    %10 = vector.load %arg7[%c0_15, %c0_16, %c0_17, %c0_18] : memref<1x2x16x200xf32, #tpu.memory_space<vmem>>, vector<1x2x16x200xf32>
    %c0_19 = arith.constant 0 : index
    %c0_20 = arith.constant 0 : index
    %c0_21 = arith.constant 0 : index
    %c0_22 = arith.constant 0 : index
    %11 = vector.load %arg8[%c0_19, %c0_20, %c0_21, %c0_22] : memref<1x2x16x200xf32, #tpu.memory_space<vmem>>, vector<1x2x16x200xf32>
    %cst = arith.constant 0.000000e+00 : f32
    %12 = vector.broadcast %cst : f32 to vector<1x16x200xf32>
    %13 = arith.cmpf ogt, %3, %12 : vector<1x16x200xf32>
    %14 = arith.extui %13 : vector<1x16x200xi1> to vector<1x16x200xi32>
    %15 = arith.sitofp %14 : vector<1x16x200xi32> to vector<1x16x200xf32>
    %16 = arith.mulf %5, %7 : vector<1x16x200xf32>
    %17 = arith.mulf %15, %16 : vector<1x16x200xf32>
    %c0_23 = arith.constant 0 : index
    %c0_24 = arith.constant 0 : index
    %c0_25 = arith.constant 0 : index
    %18 = vector.load %arg10[%c0_23, %c0_24, %c0_25] : memref<1x16x200xf32, #tpu.memory_space<vmem>>, vector<1x1x200xf32>
    %cst_26 = arith.constant dense<0.000000e+00> : vector<1x200xf32>
    %19 = vector.multi_reduction <add>, %17, %cst_26 [1] : vector<1x16x200xf32> to vector<1x200xf32>
    %20 = vector.shape_cast %19 : vector<1x200xf32> to vector<1x1x200xf32>
    %21 = arith.addf %18, %20 : vector<1x1x200xf32>
    %c0_27 = arith.constant 0 : index
    %c0_28 = arith.constant 0 : index
    %c0_29 = arith.constant 0 : index
    %22 = vector.load %arg10[%c0_27, %c0_28, %c0_29] : memref<1x16x200xf32, #tpu.memory_space<vmem>>, vector<1x1x200xf32>
    tpu.vector_store %arg10[%c0_27, %c0_28, %c0_29], %21 {strides = array<i32>} : memref<1x16x200xf32, #tpu.memory_space<vmem>>, vector<1x1x200xf32>,
    %23 = arith.addf %15, %5 : vector<1x16x200xf32>
    %24 = arith.mulf %23, %7 : vector<1x16x200xf32>
    %cst_30 = arith.constant 0.000000e+00 : f32
    %cst_31 = arith.constant 1.000000e+00 : f32
    %25 = vector.broadcast %cst_30 : f32 to vector<1x16x200xf32>
    %26 = arith.maximumf %25, %24 : vector<1x16x200xf32>
    %27 = vector.broadcast %cst_31 : f32 to vector<1x16x200xf32>
    %28 = arith.minimumf %27, %26 : vector<1x16x200xf32>
    %c0_32 = arith.constant 0 : index
    %c1 = arith.constant 1 : index
    %c0_33 = arith.constant 0 : index
    %29 = vector.load %arg10[%c0_32, %c1, %c0_33] : memref<1x16x200xf32, #tpu.memory_space<vmem>>, vector<1x1x200xf32>
    %cst_34 = arith.constant dense<0.000000e+00> : vector<1x200xf32>
    %30 = vector.multi_reduction <add>, %28, %cst_34 [1] : vector<1x16x200xf32> to vector<1x200xf32>
    %31 = vector.shape_cast %30 : vector<1x200xf32> to vector<1x1x200xf32>
    %32 = arith.addf %29, %31 : vector<1x1x200xf32>
    %c0_35 = arith.constant 0 : index
    %c1_36 = arith.constant 1 : index
    %c0_37 = arith.constant 0 : index
    %33 = vector.load %arg10[%c0_35, %c1_36, %c0_37] : memref<1x16x200xf32, #tpu.memory_space<vmem>>, vector<1x1x200xf32>
    tpu.vector_store %arg10[%c0_35, %c1_36, %c0_37], %32 {strides = array<i32>} : memref<1x16x200xf32, #tpu.memory_space<vmem>>, vector<1x1x200xf32>,
    %cst_38 = arith.constant 0.000000e+00 : f32
    %34 = vector.broadcast %cst_38 : f32 to vector<1x16x200xf32>
    %35 = arith.maximumf %3, %34 : vector<1x16x200xf32>
    %36 = math.absf %3 : vector<1x16x200xf32>
    %cst_39 = arith.constant 0.000000e+00 : f32
    %37 = vector.broadcast %cst_39 : f32 to vector<1x16x200xf32>
    %38 = arith.subf %37, %36 : vector<1x16x200xf32>
    %39 = math.exp %38 : vector<1x16x200xf32>
    %40 = math.log1p %39 : vector<1x16x200xf32>
    %41 = arith.addf %35, %40 : vector<1x16x200xf32>
    %cst_40 = arith.constant 1.130000e+00 : f32
    %42 = vector.broadcast %cst_40 : f32 to vector<1x16x200xf32>
    %43 = arith.mulf %42, %5 : vector<1x16x200xf32>
    %cst_41 = arith.constant 1.000000e+00 : f32
    %44 = vector.broadcast %cst_41 : f32 to vector<1x16x200xf32>
    %45 = arith.addf %44, %43 : vector<1x16x200xf32>
    %46 = arith.mulf %41, %45 : vector<1x16x200xf32>
    %cst_42 = arith.constant 2.130000e+00 : f32
    %47 = vector.broadcast %cst_42 : f32 to vector<1x16x200xf32>
    %48 = arith.mulf %47, %5 : vector<1x16x200xf32>
    %49 = arith.mulf %48, %3 : vector<1x16x200xf32>
    %50 = arith.subf %46, %49 : vector<1x16x200xf32>
    %51 = arith.mulf %50, %7 : vector<1x16x200xf32>
    %c0_43 = arith.constant 0 : index
    %c2 = arith.constant 2 : index
    %c0_44 = arith.constant 0 : index
    %52 = vector.load %arg10[%c0_43, %c2, %c0_44] : memref<1x16x200xf32, #tpu.memory_space<vmem>>, vector<1x1x200xf32>
    %cst_45 = arith.constant dense<0.000000e+00> : vector<1x200xf32>
    %53 = vector.multi_reduction <add>, %51, %cst_45 [1] : vector<1x16x200xf32> to vector<1x200xf32>
    %54 = vector.shape_cast %53 : vector<1x200xf32> to vector<1x1x200xf32>
    %55 = arith.addf %52, %54 : vector<1x1x200xf32>
    %c0_46 = arith.constant 0 : index
    %c2_47 = arith.constant 2 : index
    %c0_48 = arith.constant 0 : index
    %56 = vector.load %arg10[%c0_46, %c2_47, %c0_48] : memref<1x16x200xf32, #tpu.memory_space<vmem>>, vector<1x1x200xf32>
    tpu.vector_store %arg10[%c0_46, %c2_47, %c0_48], %55 {strides = array<i32>} : memref<1x16x200xf32, #tpu.memory_space<vmem>>, vector<1x1x200xf32>,
    %c0_49 = arith.constant 0 : index
    %c3 = arith.constant 3 : index
    %c0_50 = arith.constant 0 : index
    %57 = vector.load %arg10[%c0_49, %c3, %c0_50] : memref<1x16x200xf32, #tpu.memory_space<vmem>>, vector<1x1x200xf32>
    %cst_51 = arith.constant dense<0.000000e+00> : vector<1x200xf32>
    %58 = vector.multi_reduction <add>, %7, %cst_51 [1] : vector<1x16x200xf32> to vector<1x200xf32>
    %59 = vector.shape_cast %58 : vector<1x200xf32> to vector<1x1x200xf32>
    %60 = arith.addf %57, %59 : vector<1x1x200xf32>
    %c0_52 = arith.constant 0 : index
    %c3_53 = arith.constant 3 : index
    %c0_54 = arith.constant 0 : index
    %61 = vector.load %arg10[%c0_52, %c3_53, %c0_54] : memref<1x16x200xf32, #tpu.memory_space<vmem>>, vector<1x1x200xf32>
    tpu.vector_store %arg10[%c0_52, %c3_53, %c0_54], %60 {strides = array<i32>} : memref<1x16x200xf32, #tpu.memory_space<vmem>>, vector<1x1x200xf32>,
    %62 = arith.subf %8, %9 : vector<1x16x200xf32>
    %63 = arith.mulf %62, %62 : vector<1x16x200xf32>
    %cst_55 = arith.constant 5.000000e-01 : f32
    %64 = vector.broadcast %cst_55 : f32 to vector<1x16x200xf32>
    %65 = arith.cmpf ogt, %9, %64 : vector<1x16x200xf32>
    %66 = arith.extui %65 : vector<1x16x200xi1> to vector<1x16x200xi32>
    %67 = arith.sitofp %66 : vector<1x16x200xi32> to vector<1x16x200xf32>
    %cst_56 = arith.constant 5.000000e-01 : f32
    %68 = vector.broadcast %cst_56 : f32 to vector<1x16x200xf32>
    %69 = arith.cmpf olt, %9, %68 : vector<1x16x200xf32>
    %70 = arith.extui %69 : vector<1x16x200xi1> to vector<1x16x200xi32>
    %71 = arith.sitofp %70 : vector<1x16x200xi32> to vector<1x16x200xf32>
    %72 = arith.mulf %63, %67 : vector<1x16x200xf32>
    %c0_57 = arith.constant 0 : index
    %c4 = arith.constant 4 : index
    %c0_58 = arith.constant 0 : index
    %73 = vector.load %arg10[%c0_57, %c4, %c0_58] : memref<1x16x200xf32, #tpu.memory_space<vmem>>, vector<1x1x200xf32>
    %cst_59 = arith.constant dense<0.000000e+00> : vector<1x200xf32>
    %74 = vector.multi_reduction <add>, %72, %cst_59 [1] : vector<1x16x200xf32> to vector<1x200xf32>
    %75 = vector.shape_cast %74 : vector<1x200xf32> to vector<1x1x200xf32>
    %76 = arith.addf %73, %75 : vector<1x1x200xf32>
    %c0_60 = arith.constant 0 : index
    %c4_61 = arith.constant 4 : index
    %c0_62 = arith.constant 0 : index
    %77 = vector.load %arg10[%c0_60, %c4_61, %c0_62] : memref<1x16x200xf32, #tpu.memory_space<vmem>>, vector<1x1x200xf32>
    tpu.vector_store %arg10[%c0_60, %c4_61, %c0_62], %76 {strides = array<i32>} : memref<1x16x200xf32, #tpu.memory_space<vmem>>, vector<1x1x200xf32>,
    %c0_63 = arith.constant 0 : index
    %c5 = arith.constant 5 : index
    %c0_64 = arith.constant 0 : index
    %78 = vector.load %arg10[%c0_63, %c5, %c0_64] : memref<1x16x200xf32, #tpu.memory_space<vmem>>, vector<1x1x200xf32>
    %cst_65 = arith.constant dense<0.000000e+00> : vector<1x200xf32>
    %79 = vector.multi_reduction <add>, %67, %cst_65 [1] : vector<1x16x200xf32> to vector<1x200xf32>
    %80 = vector.shape_cast %79 : vector<1x200xf32> to vector<1x1x200xf32>
    %81 = arith.addf %78, %80 : vector<1x1x200xf32>
    %c0_66 = arith.constant 0 : index
    %c5_67 = arith.constant 5 : index
    %c0_68 = arith.constant 0 : index
    %82 = vector.load %arg10[%c0_66, %c5_67, %c0_68] : memref<1x16x200xf32, #tpu.memory_space<vmem>>, vector<1x1x200xf32>
    tpu.vector_store %arg10[%c0_66, %c5_67, %c0_68], %81 {strides = array<i32>} : memref<1x16x200xf32, #tpu.memory_space<vmem>>, vector<1x1x200xf32>,
    %83 = arith.mulf %63, %71 : vector<1x16x200xf32>
    %c0_69 = arith.constant 0 : index
    %c6 = arith.constant 6 : index
    %c0_70 = arith.constant 0 : index
    %84 = vector.load %arg10[%c0_69, %c6, %c0_70] : memref<1x16x200xf32, #tpu.memory_space<vmem>>, vector<1x1x200xf32>
    %cst_71 = arith.constant dense<0.000000e+00> : vector<1x200xf32>
    %85 = vector.multi_reduction <add>, %83, %cst_71 [1] : vector<1x16x200xf32> to vector<1x200xf32>
    %86 = vector.shape_cast %85 : vector<1x200xf32> to vector<1x1x200xf32>
    %87 = arith.addf %84, %86 : vector<1x1x200xf32>
    %c0_72 = arith.constant 0 : index
    %c6_73 = arith.constant 6 : index
    %c0_74 = arith.constant 0 : index
    %88 = vector.load %arg10[%c0_72, %c6_73, %c0_74] : memref<1x16x200xf32, #tpu.memory_space<vmem>>, vector<1x1x200xf32>
    tpu.vector_store %arg10[%c0_72, %c6_73, %c0_74], %87 {strides = array<i32>} : memref<1x16x200xf32, #tpu.memory_space<vmem>>, vector<1x1x200xf32>,
    %c0_75 = arith.constant 0 : index
    %c7 = arith.constant 7 : index
    %c0_76 = arith.constant 0 : index
    %89 = vector.load %arg10[%c0_75, %c7, %c0_76] : memref<1x16x200xf32, #tpu.memory_space<vmem>>, vector<1x1x200xf32>
    %cst_77 = arith.constant dense<0.000000e+00> : vector<1x200xf32>
    %90 = vector.multi_reduction <add>, %71, %cst_77 [1] : vector<1x16x200xf32> to vector<1x200xf32>
    %91 = vector.shape_cast %90 : vector<1x200xf32> to vector<1x1x200xf32>
    %92 = arith.addf %89, %91 : vector<1x1x200xf32>
    %c0_78 = arith.constant 0 : index
    %c7_79 = arith.constant 7 : index
    %c0_80 = arith.constant 0 : index
    %93 = vector.load %arg10[%c0_78, %c7_79, %c0_80] : memref<1x16x200xf32, #tpu.memory_space<vmem>>, vector<1x1x200xf32>
    tpu.vector_store %arg10[%c0_78, %c7_79, %c0_80], %92 {strides = array<i32>} : memref<1x16x200xf32, #tpu.memory_space<vmem>>, vector<1x1x200xf32>,
    %94 = vector.extract_strided_slice %10 {offsets = [0, 0, 0, 0], sizes = [1, 1, 16, 200], strides = [1, 1, 1, 1]} : vector<1x2x16x200xf32> to vector<1x1x16x200xf32>
    %95 = vector.shape_cast %94 : vector<1x1x16x200xf32> to vector<1x16x200xf32>
    %96 = vector.extract_strided_slice %11 {offsets = [0, 0, 0, 0], sizes = [1, 1, 16, 200], strides = [1, 1, 1, 1]} : vector<1x2x16x200xf32> to vector<1x1x16x200xf32>
    %97 = vector.shape_cast %96 : vector<1x1x16x200xf32> to vector<1x16x200xf32>
    %98 = arith.subf %95, %97 : vector<1x16x200xf32>
    %99 = math.absf %98 : vector<1x16x200xf32>
    %100 = vector.extract_strided_slice %10 {offsets = [0, 1, 0, 0], sizes = [1, 1, 16, 200], strides = [1, 1, 1, 1]} : vector<1x2x16x200xf32> to vector<1x1x16x200xf32>
    %101 = vector.shape_cast %100 : vector<1x1x16x200xf32> to vector<1x16x200xf32>
    %102 = vector.extract_strided_slice %11 {offsets = [0, 1, 0, 0], sizes = [1, 1, 16, 200], strides = [1, 1, 1, 1]} : vector<1x2x16x200xf32> to vector<1x1x16x200xf32>
    %103 = vector.shape_cast %102 : vector<1x1x16x200xf32> to vector<1x16x200xf32>
    %104 = arith.subf %101, %103 : vector<1x16x200xf32>
    %105 = math.absf %104 : vector<1x16x200xf32>
    %106 = arith.addf %99, %105 : vector<1x16x200xf32>
    %107 = arith.mulf %106, %16 : vector<1x16x200xf32>
    %c0_81 = arith.constant 0 : index
    %c8 = arith.constant 8 : index
    %c0_82 = arith.constant 0 : index
    %108 = vector.load %arg10[%c0_81, %c8, %c0_82] : memref<1x16x200xf32, #tpu.memory_space<vmem>>, vector<1x1x200xf32>
    %cst_83 = arith.constant dense<0.000000e+00> : vector<1x200xf32>
    %109 = vector.multi_reduction <add>, %107, %cst_83 [1] : vector<1x16x200xf32> to vector<1x200xf32>
    %110 = vector.shape_cast %109 : vector<1x200xf32> to vector<1x1x200xf32>
    %111 = arith.addf %108, %110 : vector<1x1x200xf32>
    %c0_84 = arith.constant 0 : index
    %c8_85 = arith.constant 8 : index
    %c0_86 = arith.constant 0 : index
    %112 = vector.load %arg10[%c0_84, %c8_85, %c0_86] : memref<1x16x200xf32, #tpu.memory_space<vmem>>, vector<1x1x200xf32>
    tpu.vector_store %arg10[%c0_84, %c8_85, %c0_86], %111 {strides = array<i32>} : memref<1x16x200xf32, #tpu.memory_space<vmem>>, vector<1x1x200xf32>,
    %c0_87 = arith.constant 0 : index
    %c9 = arith.constant 9 : index
    %c0_88 = arith.constant 0 : index
    %113 = vector.load %arg10[%c0_87, %c9, %c0_88] : memref<1x16x200xf32, #tpu.memory_space<vmem>>, vector<1x1x200xf32>
    %cst_89 = arith.constant dense<0.000000e+00> : vector<1x200xf32>
    %114 = vector.multi_reduction <add>, %16, %cst_89 [1] : vector<1x16x200xf32> to vector<1x200xf32>
    %115 = vector.shape_cast %114 : vector<1x200xf32> to vector<1x1x200xf32>
    %116 = arith.addf %113, %115 : vector<1x1x200xf32>
    %c0_90 = arith.constant 0 : index
    %c9_91 = arith.constant 9 : index
    %c0_92 = arith.constant 0 : index
    %117 = vector.load %arg10[%c0_90, %c9_91, %c0_92] : memref<1x16x200xf32, #tpu.memory_space<vmem>>, vector<1x1x200xf32>
    tpu.vector_store %arg10[%c0_90, %c9_91, %c0_92], %116 {strides = array<i32>} : memref<1x16x200xf32, #tpu.memory_space<vmem>>, vector<1x1x200xf32>,
    %c0_i32_93 = arith.constant 0 : i32
    %118 = arith.cmpi eq, %arg1, %c0_i32_93 : i32
    %119 = arith.extui %118 : i1 to i32
    %c0_i32_94 = arith.constant 0 : i32
    %120 = arith.cmpi ne, %119, %c0_i32_94 : i32
    scf.if %120 {
      %c0_95 = arith.constant 0 : index
      %c0_96 = arith.constant 0 : index
      %c0_97 = arith.constant 0 : index
      %121 = vector.load %arg10[%c0_95, %c0_96, %c0_97] : memref<1x16x200xf32, #tpu.memory_space<vmem>>, vector<1x16x200xf32>
      %cst_98 = arith.constant dense<0.000000e+00> : vector<1x16xf32>
      %122 = vector.multi_reduction <add>, %121, %cst_98 [2] : vector<1x16x200xf32> to vector<1x16xf32>
      %123 = vector.shape_cast %122 : vector<1x16xf32> to vector<1x16x1xf32>
      %124 = vector.shape_cast %123 : vector<1x16x1xf32> to vector<1x16x1xf32>
      %125 = vector.broadcast %124 : vector<1x16x1xf32> to vector<1x16x128xf32>
      %c0_99 = arith.constant 0 : index
      %c0_100 = arith.constant 0 : index
      %c0_101 = arith.constant 0 : index
      %126 = vector.load %arg9[%c0_99, %c0_100, %c0_101] : memref<1x16x128xf32, #tpu.memory_space<vmem>>, vector<1x16x128xf32>
      tpu.vector_store %arg9[%c0_99, %c0_100, %c0_101], %125 {strides = array<i32>} : memref<1x16x128xf32, #tpu.memory_space<vmem>>, vector<1x16x128xf32>,
    } else {
    }
    return
  }
  func.func @transform_0(%arg0: i32, %arg1: i32) -> (i32, i32, i32) {
    %c0_i32 = arith.constant 0 : i32
    %c0_i32_0 = arith.constant 0 : i32
    return %arg0, %arg1, %c0_i32 : i32, i32, i32
  }
  func.func @transform_1(%arg0: i32, %arg1: i32) -> (i32, i32, i32) {
    %c0_i32 = arith.constant 0 : i32
    %c0_i32_0 = arith.constant 0 : i32
    return %arg0, %arg1, %c0_i32 : i32, i32, i32
  }
  func.func @transform_2(%arg0: i32, %arg1: i32) -> (i32, i32, i32) {
    %c0_i32 = arith.constant 0 : i32
    %c0_i32_0 = arith.constant 0 : i32
    return %arg0, %arg1, %c0_i32 : i32, i32, i32
  }
  func.func @transform_3(%arg0: i32, %arg1: i32) -> (i32, i32, i32) {
    %c0_i32 = arith.constant 0 : i32
    %c0_i32_0 = arith.constant 0 : i32
    return %arg0, %arg1, %c0_i32 : i32, i32, i32
  }
  func.func @transform_4(%arg0: i32, %arg1: i32) -> (i32, i32, i32) {
    %c0_i32 = arith.constant 0 : i32
    %c0_i32_0 = arith.constant 0 : i32
    return %arg0, %arg1, %c0_i32 : i32, i32, i32
  }
  func.func @transform_5(%arg0: i32, %arg1: i32) -> (i32, i32, i32, i32) {
    %c0_i32 = arith.constant 0 : i32
    %c0_i32_0 = arith.constant 0 : i32
    %c0_i32_1 = arith.constant 0 : i32
    return %arg0, %c0_i32, %arg1, %c0_i32_0 : i32, i32, i32, i32
  }
  func.func @transform_6(%arg0: i32, %arg1: i32) -> (i32, i32, i32, i32) {
    %c0_i32 = arith.constant 0 : i32
    %c0_i32_0 = arith.constant 0 : i32
    %c0_i32_1 = arith.constant 0 : i32
    return %arg0, %c0_i32, %arg1, %c0_i32_0 : i32, i32, i32, i32
  }
  func.func @transform_7(%arg0: i32, %arg1: i32) -> (i32, i32, i32) {
    %c0_i32 = arith.constant 0 : i32
    %c0_i32_0 = arith.constant 0 : i32
    %c0_i32_1 = arith.constant 0 : i32
    return %arg0, %c0_i32, %c0_i32_0 : i32, i32, i32
  }
}

</mosaic_0001>

<llo_original>
// kernel: tpu_custom_call.1
$region0: #{tpu_custom_call.1}
  #allocation0 [shape = 'u32[]', space=smem, size = 0x4, offset = 0x4, fixed_abs, tag = 'smem constant byte address 0x4 - core index']
  #allocation1 [shape = 'u32[144,128]{1,0:T(1,128)}', space=vmem, size = 0x12000, scoped, tag = 'internal scratch']
  #allocation2 [shape = 'f32[1,16,200]{2,1,0:T(8,128)}', space=vmem, size = 0x4000, scoped, tag = 'scratch operand']
  %s0 = inlined_call_operand.hbm [shape: f32[2,16,200], index: 0, kind: input, shape index: {}]
  %s1 = inlined_call_operand.hbm [shape: bf16[2,16,200], index: 1, kind: input, shape index: {}]
  %s2 = inlined_call_operand.hbm [shape: bf16[2,16,200], index: 2, kind: input, shape index: {}]
  %s3 = inlined_call_operand.hbm [shape: f32[2,16,200], index: 3, kind: input, shape index: {}]
  %s4 = inlined_call_operand.hbm [shape: f32[2,16,200], index: 4, kind: input, shape index: {}]
  %s5 = inlined_call_operand.hbm [shape: f32[2,2,16,200], index: 5, kind: input, shape index: {}]
  %s6 = inlined_call_operand.hbm [shape: f32[2,2,16,200], index: 6, kind: input, shape index: {}]
  %s7 = inlined_call_operand.hbm [shape: f32[2,16,128], index: 7, kind: output, shape index: {}]
  %s8 = sld [smem:[#allocation0]]
  $region97: #{tpu_custom_call.1} parent=0
    _
  %s10 = ssub.s32 1, %s8
  %s11 = scalar_select 0, %s10, %s8
  $region1: #{tpu_custom_call.1} parent=0
    #allocation3 [shape = 'u8[32768]{0}', space=vmem, size = 0x8000, scoped, tag = 'input window, operand 0']
    #allocation4 [shape = 's32[2]{0}', space=sflag, size = 0x8, scoped, tag = 'scoped memory for tpu_custom_call.1']
    #allocation5 [shape = 's32[2]{0}', space=sflag, size = 0x8, scoped, tag = 'scoped memory for tpu_custom_call.1']
    #allocation6 [shape = 'u8[16384]{0}', space=vmem, size = 0x4000, scoped, tag = 'input window, operand 1']
    #allocation7 [shape = 's32[2]{0}', space=sflag, size = 0x8, scoped, tag = 'scoped memory for tpu_custom_call.1']
    #allocation8 [shape = 'u8[16384]{0}', space=vmem, size = 0x4000, scoped, tag = 'input window, operand 2']
    #allocation9 [shape = 'u8[32768]{0}', space=vmem, size = 0x8000, scoped, tag = 'input window, operand 3']
    #allocation10 [shape = 's32[2]{0}', space=sflag, size = 0x8, scoped, tag = 'scoped memory for tpu_custom_call.1']
    #allocation11 [shape = 'u8[32768]{0}', space=vmem, size = 0x8000, scoped, tag = 'input window, operand 4']
    #allocation12 [shape = 'u8[65536]{0}', space=vmem, size = 0x10000, scoped, tag = 'input window, operand 5']
    #allocation13 [shape = 's32[2]{0}', space=sflag, size = 0x8, scoped, tag = 'scoped memory for tpu_custom_call.1']
    #allocation14 [shape = 'u8[65536]{0}', space=vmem, size = 0x10000, scoped, tag = 'input window, operand 6']
    #allocation15 [shape = 'u8[16384]{0}', space=vmem, size = 0x4000, scoped, tag = 'output window, operand 0']
    %12 = vsyncpa [#allocation4], 0
    %s13 = scalar_lea.sflag [#allocation4], 1
    %14 = vsyncpa %s13, 0
    %15 = vsyncpa [#allocation7], 0
    %s16 = scalar_lea.sflag [#allocation7], 1
    %17 = vsyncpa %s16, 0
    %18 = vsyncpa [#allocation10], 0
    %s19 = scalar_lea.sflag [#allocation10], 1
    %20 = vsyncpa %s19, 0
    %21 = vsyncpa [#allocation13], 0
    %s22 = scalar_lea.sflag [#allocation13], 1
    %23 = vsyncpa %s22, 0
    %24 = vsyncpa [#allocation5], 0
    %s25 = scalar_lea.sflag [#allocation5], 1
    %26 = vsyncpa %s25, 0
    loop: start=0, step=1, limit=4
    $region2: #{tpu_custom_call.1} parent=1 // loop_pre_header
      _
    $region3: #{tpu_custom_call.1} parent=1 // loop_header
      %s28 = sphi 0, %s32
      %p29 = scmp.ge.s32.totalorder %s28, 4
      %s35 = sphi 0, %s47
      %s36 = sphi 0, %s43
      %s37 = sphi 0, %s35
      %s38 = sphi 0, %s36
      %s39 = sphi 0, %s37
      %s40 = sphi 0, %s38
      %s52 = sphi 0, %s54
      %s55 = sphi 0, %s52
      %s56 = sphi 0, %s55
      %s72 = sphi 0, %s56
      %s80 = sphi 0, %s82
      %s83 = sphi 0, %s80
      %s84 = sphi 0, %s83
      %s100 = sphi 0, %s84
      %s108 = sphi 0, %s110
      %s111 = sphi 0, %s108
      %s112 = sphi 0, %s111
      %s128 = sphi 0, %s112
      %s136 = sphi 0, %s138
      %s139 = sphi 0, %s136
      %s140 = sphi 0, %s139
      %s156 = sphi 0, %s140
      %s164 = sphi 0, %s166
      %s167 = sphi 0, %s164
      %s168 = sphi 0, %s167
      %s184 = sphi 0, %s168
      %s192 = sphi 0, %s194
      %s195 = sphi 0, %s192
      %s196 = sphi 0, %s195
      %s212 = sphi 0, %s196
      %s220 = sphi 0, %s222
      %s223 = sphi 0, %s220
      %s224 = sphi 0, %s223
      %s240 = sphi 0, %s224
      %s246 = sphi 0, %s248
      %s249 = sphi 0, %s246
      %s250 = sphi 0, %s249
      %s266 = sphi 0, %s250
    $region4: #{tpu_custom_call.1} parent=1 // loop_header_branch
      %31 = sbr.rel (%p29) target = $region8
    $region5: #{tpu_custom_call.1} parent=1 // loop_body
      %s33 = ssub.s32 %s28, 1
      %s34 = ssub.s32 %s28, 2
      %s41 = sadd.s32 1, %s36
      %p42 = scmp.ge.s32.totalorder %s41, 1
      %s43 = scalar_select %p42, 0, %s41
      %s44 = sadd.s32 1, %s35
      %s45 = scalar_select %p42, %s44, %s35
      %p46 = scmp.ge.s32.totalorder %s45, 2
      %s47 = scalar_select %p46, 0, %s45
      %s48 = ssub.s32 %s35, %s47
      %s49 = ssub.s32 %s36, %s43
      %s50 = sor.u32 %s48, %s49
      %p51 = scmp.eq.s32.totalorder %s50, 0
      %s53 = sadd.s32 %s52, 1
      %s54 = scalar_select %p51, %s52, %s53
      %p57 = pneg %p51
      %p58 = scmp.eq.s32.totalorder %s28, 1
      %p59 = por %p57, %p58
      %p60 = scmp.ne.s32.totalorder %s52, %s55
      %p61 = scmp.eq.s32.totalorder %s28, 0
      %p62 = por %p60, %p61
      %p63 = scmp.ne.s32.totalorder %s52, %s55
      %p64 = scmp.eq.s32.totalorder %s33, 1
      %p65 = por %p63, %p64
      %p66 = scmp.ne.s32.totalorder %s55, %s56
      %p67 = scmp.eq.s32.totalorder %s33, 0
      %p68 = por %p66, %p67
      %p69 = scmp.ne.s32.totalorder %s55, %s56
      %p70 = scmp.eq.s32.totalorder %s34, 1
      %p71 = por %p69, %p70
      %p73 = scmp.ne.s32.totalorder %s56, %s72
      %p74 = scmp.eq.s32.totalorder %s34, 0
      %p75 = por %p73, %p74
      %s76 = ssub.s32 %s35, %s47
      %s77 = ssub.s32 %s36, %s43
      %s78 = sor.u32 %s76, %s77
      %p79 = scmp.eq.s32.totalorder %s78, 0
      %s81 = sadd.s32 %s80, 1
      %s82 = scalar_select %p79, %s80, %s81
      %p85 = pneg %p79
      %p86 = scmp.eq.s32.totalorder %s28, 1
      %p87 = por %p85, %p86
      %p88 = scmp.ne.s32.totalorder %s80, %s83
      %p89 = scmp.eq.s32.totalorder %s28, 0
      %p90 = por %p88, %p89
      %p91 = scmp.ne.s32.totalorder %s80, %s83
      %p92 = scmp.eq.s32.totalorder %s33, 1
      %p93 = por %p91, %p92
      %p94 = scmp.ne.s32.totalorder %s83, %s84
      %p95 = scmp.eq.s32.totalorder %s33, 0
      %p96 = por %p94, %p95
      %p97 = scmp.ne.s32.totalorder %s83, %s84
      %p98 = scmp.eq.s32.totalorder %s34, 1
      %p99 = por %p97, %p98
      %p101 = scmp.ne.s32.totalorder %s84, %s100
      %p102 = scmp.eq.s32.totalorder %s34, 0
      %p103 = por %p101, %p102
      %s104 = ssub.s32 %s35, %s47
      %s105 = ssub.s32 %s36, %s43
      %s106 = sor.u32 %s104, %s105
      %p107 = scmp.eq.s32.totalorder %s106, 0
      %s109 = sadd.s32 %s108, 1
      %s110 = scalar_select %p107, %s108, %s109
      %p113 = pneg %p107
      %p114 = scmp.eq.s32.totalorder %s28, 1
      %p115 = por %p113, %p114
      %p116 = scmp.ne.s32.totalorder %s108, %s111
      %p117 = scmp.eq.s32.totalorder %s28, 0
      %p118 = por %p116, %p117
      %p119 = scmp.ne.s32.totalorder %s108, %s111
      %p120 = scmp.eq.s32.totalorder %s33, 1
      %p121 = por %p119, %p120
      %p122 = scmp.ne.s32.totalorder %s111, %s112
      %p123 = scmp.eq.s32.totalorder %s33, 0
      %p124 = por %p122, %p123
      %p125 = scmp.ne.s32.totalorder %s111, %s112
      %p126 = scmp.eq.s32.totalorder %s34, 1
      %p127 = por %p125, %p126
      %p129 = scmp.ne.s32.totalorder %s112, %s128
      %p130 = scmp.eq.s32.totalorder %s34, 0
      %p131 = por %p129, %p130
      %s132 = ssub.s32 %s35, %s47
      %s133 = ssub.s32 %s36, %s43
      %s134 = sor.u32 %s132, %s133
      %p135 = scmp.eq.s32.totalorder %s134, 0
      %s137 = sadd.s32 %s136, 1
      %s138 = scalar_select %p135, %s136, %s137
      %p141 = pneg %p135
      %p142 = scmp.eq.s32.totalorder %s28, 1
      %p143 = por %p141, %p142
      %p144 = scmp.ne.s32.totalorder %s136, %s139
      %p145 = scmp.eq.s32.totalorder %s28, 0
      %p146 = por %p144, %p145
      %p147 = scmp.ne.s32.totalorder %s136, %s139
      %p148 = scmp.eq.s32.totalorder %s33, 1
      %p149 = por %p147, %p148
      %p150 = scmp.ne.s32.totalorder %s139, %s140
      %p151 = scmp.eq.s32.totalorder %s33, 0
      %p152 = por %p150, %p151
      %p153 = scmp.ne.s32.totalorder %s139, %s140
      %p154 = scmp.eq.s32.totalorder %s34, 1
      %p155 = por %p153, %p154
      %p157 = scmp.ne.s32.totalorder %s140, %s156
      %p158 = scmp.eq.s32.totalorder %s34, 0
      %p159 = por %p157, %p158
      %s160 = ssub.s32 %s35, %s47
      %s161 = ssub.s32 %s36, %s43
      %s162 = sor.u32 %s160, %s161
      %p163 = scmp.eq.s32.totalorder %s162, 0
      %s165 = sadd.s32 %s164, 1
      %s166 = scalar_select %p163, %s164, %s165
      %p169 = pneg %p163
      %p170 = scmp.eq.s32.totalorder %s28, 1
      %p171 = por %p169, %p170
      %p172 = scmp.ne.s32.totalorder %s164, %s167
      %p173 = scmp.eq.s32.totalorder %s28, 0
      %p174 = por %p172, %p173
      %p175 = scmp.ne.s32.totalorder %s164, %s167
      %p176 = scmp.eq.s32.totalorder %s33, 1
      %p177 = por %p175, %p176
      %p178 = scmp.ne.s32.totalorder %s167, %s168
      %p179 = scmp.eq.s32.totalorder %s33, 0
      %p180 = por %p178, %p179
      %p181 = scmp.ne.s32.totalorder %s167, %s168
      %p182 = scmp.eq.s32.totalorder %s34, 1
      %p183 = por %p181, %p182
      %p185 = scmp.ne.s32.totalorder %s168, %s184
      %p186 = scmp.eq.s32.totalorder %s34, 0
      %p187 = por %p185, %p186
      %s188 = ssub.s32 %s35, %s47
      %s189 = ssub.s32 %s36, %s43
      %s190 = sor.u32 %s188, %s189
      %p191 = scmp.eq.s32.totalorder %s190, 0
      %s193 = sadd.s32 %s192, 1
      %s194 = scalar_select %p191, %s192, %s193
      %p197 = pneg %p191
      %p198 = scmp.eq.s32.totalorder %s28, 1
      %p199 = por %p197, %p198
      %p200 = scmp.ne.s32.totalorder %s192, %s195
      %p201 = scmp.eq.s32.totalorder %s28, 0
      %p202 = por %p200, %p201
      %p203 = scmp.ne.s32.totalorder %s192, %s195
      %p204 = scmp.eq.s32.totalorder %s33, 1
      %p205 = por %p203, %p204
      %p206 = scmp.ne.s32.totalorder %s195, %s196
      %p207 = scmp.eq.s32.totalorder %s33, 0
      %p208 = por %p206, %p207
      %p209 = scmp.ne.s32.totalorder %s195, %s196
      %p210 = scmp.eq.s32.totalorder %s34, 1
      %p211 = por %p209, %p210
      %p213 = scmp.ne.s32.totalorder %s196, %s212
      %p214 = scmp.eq.s32.totalorder %s34, 0
      %p215 = por %p213, %p214
      %s216 = ssub.s32 %s35, %s47
      %s217 = ssub.s32 %s36, %s43
      %s218 = sor.u32 %s216, %s217
      %p219 = scmp.eq.s32.totalorder %s218, 0
      %s221 = sadd.s32 %s220, 1
      %s222 = scalar_select %p219, %s220, %s221
      %p225 = pneg %p219
      %p226 = scmp.eq.s32.totalorder %s28, 1
      %p227 = por %p225, %p226
      %p228 = scmp.ne.s32.totalorder %s220, %s223
      %p229 = scmp.eq.s32.totalorder %s28, 0
      %p230 = por %p228, %p229
      %p231 = scmp.ne.s32.totalorder %s220, %s223
      %p232 = scmp.eq.s32.totalorder %s33, 1
      %p233 = por %p231, %p232
      %p234 = scmp.ne.s32.totalorder %s223, %s224
      %p235 = scmp.eq.s32.totalorder %s33, 0
      %p236 = por %p234, %p235
      %p237 = scmp.ne.s32.totalorder %s223, %s224
      %p238 = scmp.eq.s32.totalorder %s34, 1
      %p239 = por %p237, %p238
      %p241 = scmp.ne.s32.totalorder %s224, %s240
      %p242 = scmp.eq.s32.totalorder %s34, 0
      %p243 = por %p241, %p242
      %s244 = ssub.s32 %s35, %s47
      %p245 = scmp.eq.s32.totalorder %s244, 0
      %s247 = sadd.s32 %s246, 1
      %s248 = scalar_select %p245, %s246, %s247
      %p251 = pneg %p245
      %p252 = scmp.eq.s32.totalorder %s28, 1
      %p253 = por %p251, %p252
      %p254 = scmp.ne.s32.totalorder %s246, %s249
      %p255 = scmp.eq.s32.totalorder %s28, 0
      %p256 = por %p254, %p255
      %p257 = scmp.ne.s32.totalorder %s246, %s249
      %p258 = scmp.eq.s32.totalorder %s33, 1
      %p259 = por %p257, %p258
      %p260 = scmp.ne.s32.totalorder %s249, %s250
      %p261 = scmp.eq.s32.totalorder %s33, 0
      %p262 = por %p260, %p261
      %p263 = scmp.ne.s32.totalorder %s249, %s250
      %p264 = scmp.eq.s32.totalorder %s34, 1
      %p265 = por %p263, %p264
      %p267 = scmp.ne.s32.totalorder %s250, %s266
      %p268 = scmp.eq.s32.totalorder %s34, 0
      %p269 = por %p267, %p268
      %p270 = scmp.le.s32.totalorder 1, %s28
      %p271 = scmp.lt.s32.totalorder %s28, 3
      %p272 = pnand %p270, %p271
      %p273 = pneg %p272
      // Predicated region
      $region9: #{tpu_custom_call.1} parent=5 // pred_check
        _
      $region10: #{tpu_custom_call.1} parent=5 // pred_check_branch
        %275 = sbr.rel (%p272) target = $region12
      $region11: #{tpu_custom_call.1} parent=5 // pred_region
        %s276 = ssub.s32 %s28, 1
      $region12: #{tpu_custom_call.1} parent=5 // pred_fallthru
        _
      %p277 = scmp.lt.s32.totalorder %s28, 2
      // Predicated region
      $region13: #{tpu_custom_call.1} parent=5 // pred_check
        %p278 = pneg %p277
      $region14: #{tpu_custom_call.1} parent=5 // pred_check_branch
        %280 = sbr.rel (%p278) target = $region16
      $region15: #{tpu_custom_call.1} parent=5 // pred_region
        // Predicated region
        $region17: #{tpu_custom_call.1} parent=15 // pred_check
          %p281 = pneg %p62
        $region18: #{tpu_custom_call.1} parent=15 // pred_check_branch
          %283 = sbr.rel (%p281) target = $region20
        $region19: #{tpu_custom_call.1} parent=15 // pred_region
          %s284 = sand.u32 %s52, 1
          %s285 = scalar_lea.sflag [#allocation4], %s284
          %s286 = sand.u32 %s52, 1
          %s287 = smul.addr %s286, 32
          %s288 = scalar_lea.vmem [#allocation3], %s287
          %s289 = smul.u32 2, %s36
          %s291 = ssub.s32 512, 512
          %292 = vsyncadd %s285, %s291
          %s293 = smul.addr %s289, 2
          %s294 = smul.addr %s35, 4
          %s295 = sadd.s32 %s293, %s294
          %s296 = smul.addr %s295, 128
          %s297 = scalar_lea.hbm %s0, %s296
          %s298 = sshll.u32 %s288, 4
          %s299 = int_to_ptr.vmem [resolvable:$true] %s298
          %304 = dma.hbm_to_vmem [thread:$0]  %s297, 512, %s299, %s285, 256, 256, 16
        $region20: #{tpu_custom_call.1} parent=15 // pred_fallthru
          _
        // Predicated region
        $region21: #{tpu_custom_call.1} parent=15 // pred_check
          %p305 = pneg %p90
        $region22: #{tpu_custom_call.1} parent=15 // pred_check_branch
          %307 = sbr.rel (%p305) target = $region24
        $region23: #{tpu_custom_call.1} parent=15 // pred_region
          %s308 = sand.u32 %s28, 1
          %s309 = scalar_lea.sflag [#allocation7], %s308
          %s310 = sand.u32 %s80, 1
          %s311 = smul.addr %s310, 16
          %s312 = scalar_lea.vmem [#allocation6], %s311
          %s313 = smul.u32 2, %s36
          %s315 = ssub.s32 256, 256
          %316 = vsyncadd %s309, %s315
          %s317 = smul.addr %s313, 2
          %s318 = smul.addr %s35, 4
          %s319 = sadd.s32 %s317, %s318
          %s320 = smul.addr %s319, 64
          %s321 = scalar_lea.hbm %s1, %s320
          %s322 = sshll.u32 %s312, 4
          %s323 = int_to_ptr.vmem [resolvable:$true] %s322
          %328 = dma.hbm_to_vmem [thread:$0]  %s321, 256, %s323, %s309, 128, 128, 8
        $region24: #{tpu_custom_call.1} parent=15 // pred_fallthru
          _
        // Predicated region
        $region25: #{tpu_custom_call.1} parent=15 // pred_check
          %p329 = pneg %p118
        $region26: #{tpu_custom_call.1} parent=15 // pred_check_branch
          %331 = sbr.rel (%p329) target = $region28
        $region27: #{tpu_custom_call.1} parent=15 // pred_region
          %s332 = sand.u32 %s28, 1
          %s333 = scalar_lea.sflag [#allocation7], %s332
          %s334 = sand.u32 %s108, 1
          %s335 = smul.addr %s334, 16
          %s336 = scalar_lea.vmem [#allocation8], %s335
          %s337 = smul.u32 2, %s36
          %s339 = ssub.s32 256, 256
          %340 = vsyncadd %s333, %s339
          %s341 = smul.addr %s337, 2
          %s342 = smul.addr %s35, 4
          %s343 = sadd.s32 %s341, %s342
          %s344 = smul.addr %s343, 64
          %s345 = scalar_lea.hbm %s2, %s344
          %s346 = sshll.u32 %s336, 4
          %s347 = int_to_ptr.vmem [resolvable:$true] %s346
          %352 = dma.hbm_to_vmem [thread:$0]  %s345, 256, %s347, %s333, 128, 128, 8
        $region28: #{tpu_custom_call.1} parent=15 // pred_fallthru
          _
        // Predicated region
        $region29: #{tpu_custom_call.1} parent=15 // pred_check
          %p353 = pneg %p146
        $region30: #{tpu_custom_call.1} parent=15 // pred_check_branch
          %355 = sbr.rel (%p353) target = $region32
        $region31: #{tpu_custom_call.1} parent=15 // pred_region
          %s356 = sand.u32 %s28, 1
          %s357 = scalar_lea.sflag [#allocation10], %s356
          %s358 = sand.u32 %s136, 1
          %s359 = smul.addr %s358, 32
          %s360 = scalar_lea.vmem [#allocation9], %s359
          %s361 = smul.u32 2, %s36
          %s363 = ssub.s32 512, 512
          %364 = vsyncadd %s357, %s363
          %s365 = smul.addr %s361, 2
          %s366 = smul.addr %s35, 4
          %s367 = sadd.s32 %s365, %s366
          %s368 = smul.addr %s367, 128
          %s369 = scalar_lea.hbm %s3, %s368
          %s370 = sshll.u32 %s360, 4
          %s371 = int_to_ptr.vmem [resolvable:$true] %s370
          %376 = dma.hbm_to_vmem [thread:$0]  %s369, 512, %s371, %s357, 256, 256, 16
        $region32: #{tpu_custom_call.1} parent=15 // pred_fallthru
          _
        // Predicated region
        $region33: #{tpu_custom_call.1} parent=15 // pred_check
          %p377 = pneg %p174
        $region34: #{tpu_custom_call.1} parent=15 // pred_check_branch
          %379 = sbr.rel (%p377) target = $region36
        $region35: #{tpu_custom_call.1} parent=15 // pred_region
          %s380 = sand.u32 %s28, 1
          %s381 = scalar_lea.sflag [#allocation10], %s380
          %s382 = sand.u32 %s164, 1
          %s383 = smul.addr %s382, 32
          %s384 = scalar_lea.vmem [#allocation11], %s383
          %s385 = smul.u32 2, %s36
          %s387 = ssub.s32 512, 512
          %388 = vsyncadd %s381, %s387
          %s389 = smul.addr %s385, 2
          %s390 = smul.addr %s35, 4
          %s391 = sadd.s32 %s389, %s390
          %s392 = smul.addr %s391, 128
          %s393 = scalar_lea.hbm %s4, %s392
          %s394 = sshll.u32 %s384, 4
          %s395 = int_to_ptr.vmem [resolvable:$true] %s394
          %400 = dma.hbm_to_vmem [thread:$0]  %s393, 512, %s395, %s381, 256, 256, 16
        $region36: #{tpu_custom_call.1} parent=15 // pred_fallthru
          _
        // Predicated region
        $region37: #{tpu_custom_call.1} parent=15 // pred_check
          %p401 = pneg %p202
        $region38: #{tpu_custom_call.1} parent=15 // pred_check_branch
          %403 = sbr.rel (%p401) target = $region40
        $region39: #{tpu_custom_call.1} parent=15 // pred_region
          %s404 = sand.u32 %s28, 1
          %s405 = scalar_lea.sflag [#allocation13], %s404
          %s406 = sand.u32 %s192, 1
          %s407 = smul.addr %s406, 64
          %s408 = scalar_lea.vmem [#allocation12], %s407
          %s409 = smul.u32 2, %s36
          %s411 = ssub.s32 1024, 1024
          %412 = vsyncadd %s405, %s411
          %s413 = smul.addr %s409, 2
          %s414 = smul.addr %s35, 8
          %s415 = sadd.s32 %s413, %s414
          %s416 = smul.addr %s415, 128
          %s417 = scalar_lea.hbm %s5, %s416
          %s418 = sshll.u32 %s408, 4
          %s419 = int_to_ptr.vmem [resolvable:$true] %s418
          %424 = dma.hbm_to_vmem [thread:$0]  %s417, 1024, %s419, %s405, 256, 256, 16
        $region40: #{tpu_custom_call.1} parent=15 // pred_fallthru
          _
        // Predicated region
        $region41: #{tpu_custom_call.1} parent=15 // pred_check
          %p425 = pneg %p230
        $region42: #{tpu_custom_call.1} parent=15 // pred_check_branch
          %427 = sbr.rel (%p425) target = $region44
        $region43: #{tpu_custom_call.1} parent=15 // pred_region
          %s428 = sand.u32 %s28, 1
          %s429 = scalar_lea.sflag [#allocation13], %s428
          %s430 = sand.u32 %s220, 1
          %s431 = smul.addr %s430, 64
          %s432 = scalar_lea.vmem [#allocation14], %s431
          %s433 = smul.u32 2, %s36
          %s435 = ssub.s32 1024, 1024
          %436 = vsyncadd %s429, %s435
          %s437 = smul.addr %s433, 2
          %s438 = smul.addr %s35, 8
          %s439 = sadd.s32 %s437, %s438
          %s440 = smul.addr %s439, 128
          %s441 = scalar_lea.hbm %s6, %s440
          %s442 = sshll.u32 %s432, 4
          %s443 = int_to_ptr.vmem [resolvable:$true] %s442
          %448 = dma.hbm_to_vmem [thread:$0]  %s441, 1024, %s443, %s429, 256, 256, 16
        $region44: #{tpu_custom_call.1} parent=15 // pred_fallthru
          _
      $region16: #{tpu_custom_call.1} parent=5 // pred_fallthru
        _
      %p449 = scmp.le.s32.totalorder 1, %s28
      %p450 = scmp.lt.s32.totalorder %s28, 3
      %p451 = pnand %p449, %p450
      %p452 = pneg %p451
      // Predicated region
      $region45: #{tpu_custom_call.1} parent=5 // pred_check
        _
      $region46: #{tpu_custom_call.1} parent=5 // pred_check_branch
        %454 = sbr.rel (%p451) target = $region48
      $region47: #{tpu_custom_call.1} parent=5 // pred_region
        %s455 = ssub.s32 %s28, 1
        %s456 = sand.u32 %s55, 1
        %s457 = scalar_lea.sflag [#allocation4], %s456
        %s458 = sand.u32 %s55, 1
        %s459 = smul.addr %s458, 32
        %s460 = scalar_lea.vmem [#allocation3], %s459
        // Predicated region
        $region49: #{tpu_custom_call.1} parent=47 // pred_check
          %p461 = pneg %p68
        $region50: #{tpu_custom_call.1} parent=47 // pred_check_branch
          %463 = sbr.rel (%p461) target = $region52
        $region51: #{tpu_custom_call.1} parent=47 // pred_region
          %464 = dma.done %s457, 512
        $region52: #{tpu_custom_call.1} parent=47 // pred_fallthru
          _
        %s465 = sand.u32 %s33, 1
        %s466 = scalar_lea.sflag [#allocation7], %s465
        %s467 = sand.u32 %s83, 1
        %s468 = smul.addr %s467, 16
        %s469 = scalar_lea.vmem [#allocation6], %s468
        // Predicated region
        $region53: #{tpu_custom_call.1} parent=47 // pred_check
          %p470 = pneg %p96
        $region54: #{tpu_custom_call.1} parent=47 // pred_check_branch
          %472 = sbr.rel (%p470) target = $region56
        $region55: #{tpu_custom_call.1} parent=47 // pred_region
          %473 = dma.done %s466, 256
        $region56: #{tpu_custom_call.1} parent=47 // pred_fallthru
          _
        %s474 = sand.u32 %s33, 1
        %s475 = scalar_lea.sflag [#allocation7], %s474
        %s476 = sand.u32 %s111, 1
        %s477 = smul.addr %s476, 16
        %s478 = scalar_lea.vmem [#allocation8], %s477
        // Predicated region
        $region57: #{tpu_custom_call.1} parent=47 // pred_check
          %p479 = pneg %p124
        $region58: #{tpu_custom_call.1} parent=47 // pred_check_branch
          %481 = sbr.rel (%p479) target = $region60
        $region59: #{tpu_custom_call.1} parent=47 // pred_region
          %482 = dma.done %s475, 256
        $region60: #{tpu_custom_call.1} parent=47 // pred_fallthru
          _
        %s483 = sand.u32 %s33, 1
        %s484 = scalar_lea.sflag [#allocation10], %s483
        %s485 = sand.u32 %s139, 1
        %s486 = smul.addr %s485, 32
        %s487 = scalar_lea.vmem [#allocation9], %s486
        // Predicated region
        $region61: #{tpu_custom_call.1} parent=47 // pred_check
          %p488 = pneg %p152
        $region62: #{tpu_custom_call.1} parent=47 // pred_check_branch
          %490 = sbr.rel (%p488) target = $region64
        $region63: #{tpu_custom_call.1} parent=47 // pred_region
          %491 = dma.done %s484, 512
        $region64: #{tpu_custom_call.1} parent=47 // pred_fallthru
          _
        %s492 = sand.u32 %s33, 1
        %s493 = scalar_lea.sflag [#allocation10], %s492
        %s494 = sand.u32 %s167, 1
        %s495 = smul.addr %s494, 32
        %s496 = scalar_lea.vmem [#allocation11], %s495
        // Predicated region
        $region65: #{tpu_custom_call.1} parent=47 // pred_check
          %p497 = pneg %p180
        $region66: #{tpu_custom_call.1} parent=47 // pred_check_branch
          %499 = sbr.rel (%p497) target = $region68
        $region67: #{tpu_custom_call.1} parent=47 // pred_region
          %500 = dma.done %s493, 512
        $region68: #{tpu_custom_call.1} parent=47 // pred_fallthru
          _
        %s501 = sand.u32 %s33, 1
        %s502 = scalar_lea.sflag [#allocation13], %s501
        %s503 = sand.u32 %s195, 1
        %s504 = smul.addr %s503, 64
        %s505 = scalar_lea.vmem [#allocation12], %s504
        // Predicated region
        $region69: #{tpu_custom_call.1} parent=47 // pred_check
          %p506 = pneg %p208
        $region70: #{tpu_custom_call.1} parent=47 // pred_check_branch
          %508 = sbr.rel (%p506) target = $region72
        $region71: #{tpu_custom_call.1} parent=47 // pred_region
          %509 = dma.done %s502, 1024
        $region72: #{tpu_custom_call.1} parent=47 // pred_fallthru
          _
        %s510 = sand.u32 %s33, 1
        %s511 = scalar_lea.sflag [#allocation13], %s510
        %s512 = sand.u32 %s223, 1
        %s513 = smul.addr %s512, 64
        %s514 = scalar_lea.vmem [#allocation14], %s513
        // Predicated region
        $region73: #{tpu_custom_call.1} parent=47 // pred_check
          %p515 = pneg %p236
        $region74: #{tpu_custom_call.1} parent=47 // pred_check_branch
          %517 = sbr.rel (%p515) target = $region76
        $region75: #{tpu_custom_call.1} parent=47 // pred_region
          %518 = dma.done %s511, 1024
        $region76: #{tpu_custom_call.1} parent=47 // pred_fallthru
          _
        %s519 = sand.u32 %s55, 1
        %s520 = scalar_lea.sflag [#allocation4], %s519
        %s521 = sand.u32 %s55, 1
        %s522 = smul.addr %s521, 32
        %s523 = scalar_lea.vmem [#allocation3], %s522
        %p524 = pneg %p68
        %p525 = pneg %p65
        %s526 = sand.u32 %s33, 1
        %s527 = scalar_lea.sflag [#allocation7], %s526
        %s528 = sand.u32 %s83, 1
        %s529 = smul.addr %s528, 16
        %s530 = scalar_lea.vmem [#allocation6], %s529
        %p531 = pneg %p96
        %p532 = pneg %p93
        %s533 = sand.u32 %s33, 1
        %s534 = scalar_lea.sflag [#allocation7], %s533
        %s535 = sand.u32 %s111, 1
        %s536 = smul.addr %s535, 16
        %s537 = scalar_lea.vmem [#allocation8], %s536
        %p538 = pneg %p124
        %p539 = pneg %p121
        %s540 = sand.u32 %s33, 1
        %s541 = scalar_lea.sflag [#allocation10], %s540
        %s542 = sand.u32 %s139, 1
        %s543 = smul.addr %s542, 32
        %s544 = scalar_lea.vmem [#allocation9], %s543
        %p545 = pneg %p152
        %p546 = pneg %p149
        %s547 = sand.u32 %s33, 1
        %s548 = scalar_lea.sflag [#allocation10], %s547
        %s549 = sand.u32 %s167, 1
        %s550 = smul.addr %s549, 32
        %s551 = scalar_lea.vmem [#allocation11], %s550
        %p552 = pneg %p180
        %p553 = pneg %p177
        %s554 = sand.u32 %s33, 1
        %s555 = scalar_lea.sflag [#allocation13], %s554
        %s556 = sand.u32 %s195, 1
        %s557 = smul.addr %s556, 64
        %s558 = scalar_lea.vmem [#allocation12], %s557
        %p559 = pneg %p208
        %p560 = pneg %p205
        %s561 = sand.u32 %s33, 1
        %s562 = scalar_lea.sflag [#allocation13], %s561
        %s563 = sand.u32 %s223, 1
        %s564 = smul.addr %s563, 64
        %s565 = scalar_lea.vmem [#allocation14], %s564
        %p566 = pneg %p236
        %p567 = pneg %p233
        %p568 = pneg %p262
        %p569 = pneg %p259
        %s570 = sand.u32 %s249, 1
        %s571 = scalar_lea.sflag [#allocation5], %s570
        %s572 = sand.u32 %s249, 1
        %s573 = smul.addr %s572, 16
        %s574 = scalar_lea.vmem [#allocation15], %s573
        %s575 = smul.u32 2, %s38
        %s576 = smul.u32 2, %s38
        %s577 = smul.u32 2, %s38
        %s578 = smul.u32 2, %s38
        %s579 = smul.u32 2, %s38
        %s580 = smul.u32 2, %s38
        %s581 = smul.u32 2, %s38
        %p582 = scmp.eq.s32.totalorder %s38, 0
        // Predicated region
        $region77: #{tpu_custom_call.1} parent=47 // pred_check
          %p583 = pneg %p582
        $region78: #{tpu_custom_call.1} parent=47 // pred_check_branch
          %585 = sbr.rel (%p583) target = $region80
        $region79: #{tpu_custom_call.1} parent=47 // pred_region
          %586 = vst [vmem:[#allocation2] sm:$0xff] 0.0
          %vm587 = vcmask 588800
          %588 = vst.msk [vmem:[#allocation2 + $0x8] sm:$0xff] %vm587, 0.0
          %589 = vst [vmem:[#allocation2 + $0x10] sm:$0xff] 0.0
          %590 = vst.msk [vmem:[#allocation2 + $0x18] sm:$0xff] %vm587, 0.0
        $region80: #{tpu_custom_call.1} parent=47 // pred_fallthru
          _
        %v591 = vld [vmem:[%s460] sm:$0xff]
        %v592 = vld [vmem:[%s460 + $0x8] sm:$0xff]
        %v593 = vld [vmem:[%s460 + $0x10] sm:$0xff]
        %v594 = vld [vmem:[%s460 + $0x18] sm:$0xff]
        %v595 = vld [vmem:[%s469] sm:$0xff]
        %v596 = vld [vmem:[%s469 + $0x8] sm:$0xff]
        %v597 = vunpack.c.l.bf16 %v595
        %v598 = vunpack.c.h.bf16 %v595
        %v599 = vunpack.c.l.bf16 %v596
        %v600 = vunpack.c.h.bf16 %v596
        %v601 = vld [vmem:[%s478] sm:$0xff]
        %v602 = vld [vmem:[%s478 + $0x8] sm:$0xff]
        %v603 = vunpack.c.l.bf16 %v601
        %v604 = vunpack.c.h.bf16 %v601
        %v605 = vunpack.c.l.bf16 %v602
        %v606 = vunpack.c.h.bf16 %v602
        %v607 = vld [vmem:[%s487] sm:$0xff]
        %v608 = vld [vmem:[%s487 + $0x8] sm:$0xff]
        %v609 = vld [vmem:[%s487 + $0x10] sm:$0xff]
        %v610 = vld [vmem:[%s487 + $0x18] sm:$0xff]
        %v611 = vld [vmem:[%s496] sm:$0xff]
        %v612 = vld [vmem:[%s496 + $0x8] sm:$0xff]
        %v613 = vld [vmem:[%s496 + $0x10] sm:$0xff]
        %v614 = vld [vmem:[%s496 + $0x18] sm:$0xff]
        %v615 = vld [vmem:[%s505] sm:$0xff]
        %v616 = vld [vmem:[%s505 + $0x8] sm:$0xff]
        %v617 = vld [vmem:[%s505 + $0x10] sm:$0xff]
        %v618 = vld [vmem:[%s505 + $0x18] sm:$0xff]
        %v619 = vld [vmem:[%s505 + $0x20] sm:$0xff]
        %v620 = vld [vmem:[%s505 + $0x28] sm:$0xff]
        %v621 = vld [vmem:[%s505 + $0x30] sm:$0xff]
        %v622 = vld [vmem:[%s505 + $0x38] sm:$0xff]
        %v623 = vld [vmem:[%s514] sm:$0xff]
        %v624 = vld [vmem:[%s514 + $0x8] sm:$0xff]
        %v625 = vld [vmem:[%s514 + $0x10] sm:$0xff]
        %v626 = vld [vmem:[%s514 + $0x18] sm:$0xff]
        %v627 = vld [vmem:[%s514 + $0x20] sm:$0xff]
        %v628 = vld [vmem:[%s514 + $0x28] sm:$0xff]
        %v629 = vld [vmem:[%s514 + $0x30] sm:$0xff]
        %v630 = vld [vmem:[%s514 + $0x38] sm:$0xff]
        %vm631 = vcmp.gt.f32.partialorder %v591, 0.0
        %vm632 = vcmp.gt.f32.partialorder %v592, 0.0
        %vm633 = vcmp.gt.f32.partialorder %v593, 0.0
        %vm634 = vcmp.gt.f32.partialorder %v594, 0.0
        %v635 = vsel %vm631, 1, 0
        %v636 = vsel %vm632, 1, 0
        %v637 = vsel %vm633, 1, 0
        %v638 = vsel %vm634, 1, 0
        %v639 = vcvt.s32.f32 %v635
        %v640 = vcvt.s32.f32 %v636
        %v641 = vcvt.s32.f32 %v637
        %v642 = vcvt.s32.f32 %v638
        %v643 = vmul.f32 %v597, %v603
        %v644 = vmul.f32 %v598, %v604
        %v645 = vmul.f32 %v599, %v605
        %v646 = vmul.f32 %v600, %v606
        %v647 = vmul.f32 %v639, %v643
        %v648 = vmul.f32 %v640, %v644
        %v649 = vmul.f32 %v641, %v645
        %v650 = vmul.f32 %v642, %v646
        %v651 = vld [vmem:[#allocation2] ss:$8 sm:$0x3]
        %v652 = vadd.f32 %v647, %v649
        %v653 = vrot.slane %v652, 4
        %v654 = vadd.f32 %v652, %v653
        %v655 = vrot.slane %v654, 2
        %v656 = vadd.f32 %v654, %v655
        %v657 = vrot.slane %v656, 1
        %v658 = vadd.f32 %v656, %v657
        %vm659 = vcmask 588800
        %v660 = vsel %vm659, %v648, 0.0
        %v661 = vsel %vm659, %v650, 0.0
        %v662 = vadd.f32 %v660, %v661
        %v663 = vrot.slane %v662, 4
        %v664 = vadd.f32 %v662, %v663
        %v665 = vrot.slane %v664, 2
        %v666 = vadd.f32 %v664, %v665
        %v667 = vrot.slane %v666, 1
        %v668 = vadd.f32 %v666, %v667
        %v671 = vcombine.low %v658, %v668
        %v673 = vunpack.c.l.s4 1966171168
        %v674 = vunpack.c.0.s8 %v673
        %v675 = vlaneseq
        %v676 = vshrl.u32 %v675, 7
        %v677 = vsub.s32 %v674, %v676
        %v678 = vrot.slane %v671, %v677
        %v680 = vunpack.c.l.s4 1966171168
        %v681 = vunpack.c.0.s8 %v680
        %v682 = vlaneseq
        %v683 = vshrl.u32 %v682, 7
        %v684 = vsub.s32 %v681, %v683
        %v685 = vrot.slane %v678, %v684
        %v687 = vadd.f32 %v651, %v685
        %v688 = vlaneseq
        %vm689 = vcmp.ge.s32.totalorder %v688, 0
        %vm690 = vcmp.lt.s32.totalorder %v688, 200
        %vm691 = vmand %vm689, %vm690
        %692 = vst.msk [vmem:[#allocation2] ss:$8 sm:$0x3] %vm691, %v687
        %693 = vst.msk [vmem:[#allocation2] ss:$8 sm:$0x0] %vm691, %v687
        %v694 = vadd.f32 %v639, %v597
        %v695 = vadd.f32 %v640, %v598
        %v696 = vadd.f32 %v641, %v599
        %v697 = vadd.f32 %v642, %v600
        %v698 = vmul.f32 %v694, %v603
        %v699 = vmul.f32 %v695, %v604
        %v700 = vmul.f32 %v696, %v605
        %v701 = vmul.f32 %v697, %v606
        %v702 = vmax.f32 %v698, 0.0
        %v703 = vmax.f32 %v699, 0.0
        %v704 = vmax.f32 %v700, 0.0
        %v705 = vmax.f32 %v701, 0.0
        %v706 = vmin.f32 %v702, 1.0
        %v707 = vmin.f32 %v703, 1.0
        %v708 = vmin.f32 %v704, 1.0
        %v709 = vmin.f32 %v705, 1.0
        %s710 = scalar_lea.vmem [#allocation2], 1
        %v711 = vld [vmem:[%s710] ss:$8 sm:$0x3]
        %v712 = vadd.f32 %v706, %v708
        %v713 = vrot.slane %v712, 4
        %v714 = vadd.f32 %v712, %v713
        %v715 = vrot.slane %v714, 2
        %v716 = vadd.f32 %v714, %v715
        %v717 = vrot.slane %v716, 1
        %v718 = vadd.f32 %v716, %v717
        %v719 = vsel %vm659, %v707, 0.0
        %v720 = vsel %vm659, %v709, 0.0
        %v721 = vadd.f32 %v719, %v720
        %v722 = vrot.slane %v721, 4
        %v723 = vadd.f32 %v721, %v722
        %v724 = vrot.slane %v723, 2
        %v725 = vadd.f32 %v723, %v724
        %v726 = vrot.slane %v725, 1
        %v727 = vadd.f32 %v725, %v726
        %v730 = vcombine.low %v718, %v727
        %v732 = vunpack.c.l.s4 1966171168
        %v733 = vunpack.c.0.s8 %v732
        %v734 = vlaneseq
        %v735 = vshrl.u32 %v734, 7
        %v736 = vsub.s32 %v733, %v735
        %v737 = vrot.slane %v730, %v736
        %v739 = vunpack.c.l.s4 1966171168
        %v740 = vunpack.c.0.s8 %v739
        %v741 = vlaneseq
        %v742 = vshrl.u32 %v741, 7
        %v743 = vsub.s32 %v740, %v742
        %v744 = vrot.slane %v737, %v743
        %v746 = vadd.f32 %v711, %v744
        %747 = vst.msk [vmem:[%s710] ss:$8 sm:$0x3] %vm691, %v746
        %748 = vst.msk [vmem:[%s710] ss:$8 sm:$0x0] %vm691, %v746
        %v749 = vmax.f32 %v591, 0.0
        %v750 = vmax.f32 %v592, 0.0
        %v751 = vmax.f32 %v593, 0.0
        %v752 = vmax.f32 %v594, 0.0
        %v753 = vand.u32 2147483647, %v591
        %v754 = vand.u32 2147483647, %v592
        %v755 = vand.u32 2147483647, %v593
        %v756 = vand.u32 2147483647, %v594
        %v757 = vsub.f32 0.0, %v753
        %v758 = vsub.f32 0.0, %v754
        %v759 = vsub.f32 0.0, %v755
        %v760 = vsub.f32 0.0, %v756
        %v761 = vmul.f32 %v757, 1.442695
        %v762 = vpow.pop %v761
        %v763 = vmul.f32 %v758, 1.442695
        %v764 = vpow.pop %v763
        %v765 = vmul.f32 %v759, 1.442695
        %v766 = vpow.pop %v765
        %v767 = vmul.f32 %v760, 1.442695
        %v768 = vpow.pop %v767
        %v769 = vadd.f32 %v762, 1.0
        %v770 = vlog2.pop %v769
        %v771 = vmul.f32 %v770, 0.6931472
        %v772 = vmul.f32 -0.5, %v762
        %v773 = vadd.f32 %v772, 1.0
        %v774 = vmul.f32 %v773, %v762
        %v775 = vand.u32 2147483647, %v762
        %vm776 = vcmp.lt.f32.partialorder %v775, 0.0004427343
        %v777 = vsel %vm776, %v774, %v771
        %v778 = vadd.f32 %v764, 1.0
        %v779 = vlog2.pop %v778
        %v780 = vmul.f32 %v779, 0.6931472
        %v781 = vmul.f32 -0.5, %v764
        %v782 = vadd.f32 %v781, 1.0
        %v783 = vmul.f32 %v782, %v764
        %v784 = vand.u32 2147483647, %v764
        %vm785 = vcmp.lt.f32.partialorder %v784, 0.0004427343
        %v786 = vsel %vm785, %v783, %v780
        %v787 = vadd.f32 %v766, 1.0
        %v788 = vlog2.pop %v787
        %v789 = vmul.f32 %v788, 0.6931472
        %v790 = vmul.f32 -0.5, %v766
        %v791 = vadd.f32 %v790, 1.0
        %v792 = vmul.f32 %v791, %v766
        %v793 = vand.u32 2147483647, %v766
        %vm794 = vcmp.lt.f32.partialorder %v793, 0.0004427343
        %v795 = vsel %vm794, %v792, %v789
        %v796 = vadd.f32 %v768, 1.0
        %v797 = vlog2.pop %v796
        %v798 = vmul.f32 %v797, 0.6931472
        %v799 = vmul.f32 -0.5, %v768
        %v800 = vadd.f32 %v799, 1.0
        %v801 = vmul.f32 %v800, %v768
        %v802 = vand.u32 2147483647, %v768
        %vm803 = vcmp.lt.f32.partialorder %v802, 0.0004427343
        %v804 = vsel %vm803, %v801, %v798
        %v805 = vadd.f32 %v749, %v777
        %v806 = vadd.f32 %v750, %v786
        %v807 = vadd.f32 %v751, %v795
        %v808 = vadd.f32 %v752, %v804
        %v809 = vmul.f32 %v597, 1.13
        %v810 = vmul.f32 %v598, 1.13
        %v811 = vmul.f32 %v599, 1.13
        %v812 = vmul.f32 %v600, 1.13
        %v813 = vadd.f32 %v809, 1.0
        %v814 = vadd.f32 %v810, 1.0
        %v815 = vadd.f32 %v811, 1.0
        %v816 = vadd.f32 %v812, 1.0
        %v817 = vmul.f32 %v805, %v813
        %v818 = vmul.f32 %v806, %v814
        %v819 = vmul.f32 %v807, %v815
        %v820 = vmul.f32 %v808, %v816
        %v821 = vmul.f32 %v597, 2.13
        %v822 = vmul.f32 %v598, 2.13
        %v823 = vmul.f32 %v599, 2.13
        %v824 = vmul.f32 %v600, 2.13
        %v825 = vmul.f32 %v821, %v591
        %v826 = vmul.f32 %v822, %v592
        %v827 = vmul.f32 %v823, %v593
        %v828 = vmul.f32 %v824, %v594
        %v829 = vsub.f32 %v817, %v825
        %v830 = vsub.f32 %v818, %v826
        %v831 = vsub.f32 %v819, %v827
        %v832 = vsub.f32 %v820, %v828
        %v833 = vmul.f32 %v829, %v603
        %v834 = vmul.f32 %v830, %v604
        %v835 = vmul.f32 %v831, %v605
        %v836 = vmul.f32 %v832, %v606
        %s837 = scalar_lea.vmem [#allocation2], 2
        %v838 = vld [vmem:[%s837] ss:$8 sm:$0x3]
        %v839 = vadd.f32 %v833, %v835
        %v840 = vrot.slane %v839, 4
        %v841 = vadd.f32 %v839, %v840
        %v842 = vrot.slane %v841, 2
        %v843 = vadd.f32 %v841, %v842
        %v844 = vrot.slane %v843, 1
        %v845 = vadd.f32 %v843, %v844
        %v846 = vsel %vm659, %v834, 0.0
        %v847 = vsel %vm659, %v836, 0.0
        %v848 = vadd.f32 %v846, %v847
        %v849 = vrot.slane %v848, 4
        %v850 = vadd.f32 %v848, %v849
        %v851 = vrot.slane %v850, 2
        %v852 = vadd.f32 %v850, %v851
        %v853 = vrot.slane %v852, 1
        %v854 = vadd.f32 %v852, %v853
        %v857 = vcombine.low %v845, %v854
        %v859 = vunpack.c.l.s4 1966171168
        %v860 = vunpack.c.0.s8 %v859
        %v861 = vlaneseq
        %v862 = vshrl.u32 %v861, 7
        %v863 = vsub.s32 %v860, %v862
        %v864 = vrot.slane %v857, %v863
        %v866 = vunpack.c.l.s4 1966171168
        %v867 = vunpack.c.0.s8 %v866
        %v868 = vlaneseq
        %v869 = vshrl.u32 %v868, 7
        %v870 = vsub.s32 %v867, %v869
        %v871 = vrot.slane %v864, %v870
        %v873 = vadd.f32 %v838, %v871
        %874 = vst.msk [vmem:[%s837] ss:$8 sm:$0x3] %vm691, %v873
        %875 = vst.msk [vmem:[%s837] ss:$8 sm:$0x0] %vm691, %v873
        %s876 = scalar_lea.vmem [#allocation2], 3
        %v877 = vld [vmem:[%s876] ss:$8 sm:$0x3]
        %v878 = vadd.f32 %v603, %v605
        %v879 = vrot.slane %v878, 4
        %v880 = vadd.f32 %v878, %v879
        %v881 = vrot.slane %v880, 2
        %v882 = vadd.f32 %v880, %v881
        %v883 = vrot.slane %v882, 1
        %v884 = vadd.f32 %v882, %v883
        %v885 = vsel %vm659, %v604, 0.0
        %v886 = vsel %vm659, %v606, 0.0
        %v887 = vadd.f32 %v885, %v886
        %v888 = vrot.slane %v887, 4
        %v889 = vadd.f32 %v887, %v888
        %v890 = vrot.slane %v889, 2
        %v891 = vadd.f32 %v889, %v890
        %v892 = vrot.slane %v891, 1
        %v893 = vadd.f32 %v891, %v892
        %v896 = vcombine.low %v884, %v893
        %v898 = vunpack.c.l.s4 1966171168
        %v899 = vunpack.c.0.s8 %v898
        %v900 = vlaneseq
        %v901 = vshrl.u32 %v900, 7
        %v902 = vsub.s32 %v899, %v901
        %v903 = vrot.slane %v896, %v902
        %v905 = vunpack.c.l.s4 1966171168
        %v906 = vunpack.c.0.s8 %v905
        %v907 = vlaneseq
        %v908 = vshrl.u32 %v907, 7
        %v909 = vsub.s32 %v906, %v908
        %v910 = vrot.slane %v903, %v909
        %v912 = vadd.f32 %v877, %v910
        %913 = vst.msk [vmem:[%s876] ss:$8 sm:$0x3] %vm691, %v912
        %914 = vst.msk [vmem:[%s876] ss:$8 sm:$0x0] %vm691, %v912
        %v915 = vsub.f32 %v607, %v611
        %v916 = vsub.f32 %v608, %v612
        %v917 = vsub.f32 %v609, %v613
        %v918 = vsub.f32 %v610, %v614
        %v919 = vmul.f32 %v915, %v915
        %v920 = vmul.f32 %v916, %v916
        %v921 = vmul.f32 %v917, %v917
        %v922 = vmul.f32 %v918, %v918
        %vm923 = vcmp.gt.f32.partialorder %v611, 0.5
        %vm924 = vcmp.gt.f32.partialorder %v612, 0.5
        %vm925 = vcmp.gt.f32.partialorder %v613, 0.5
        %vm926 = vcmp.gt.f32.partialorder %v614, 0.5
        %v927 = vsel %vm923, 1, 0
        %v928 = vsel %vm924, 1, 0
        %v929 = vsel %vm925, 1, 0
        %v930 = vsel %vm926, 1, 0
        %v931 = vcvt.s32.f32 %v927
        %v932 = vcvt.s32.f32 %v928
        %v933 = vcvt.s32.f32 %v929
        %v934 = vcvt.s32.f32 %v930
        %vm935 = vcmp.lt.f32.partialorder %v611, 0.5
        %vm936 = vcmp.lt.f32.partialorder %v612, 0.5
        %vm937 = vcmp.lt.f32.partialorder %v613, 0.5
        %vm938 = vcmp.lt.f32.partialorder %v614, 0.5
        %v939 = vsel %vm935, 1, 0
        %v940 = vsel %vm936, 1, 0
        %v941 = vsel %vm937, 1, 0
        %v942 = vsel %vm938, 1, 0
        %v943 = vcvt.s32.f32 %v939
        %v944 = vcvt.s32.f32 %v940
        %v945 = vcvt.s32.f32 %v941
        %v946 = vcvt.s32.f32 %v942
        %v947 = vmul.f32 %v919, %v931
        %v948 = vmul.f32 %v920, %v932
        %v949 = vmul.f32 %v921, %v933
        %v950 = vmul.f32 %v922, %v934
        %s951 = scalar_lea.vmem [#allocation2], 4
        %v952 = vld [vmem:[%s951] ss:$8 sm:$0x3]
        %v953 = vadd.f32 %v947, %v949
        %v954 = vrot.slane %v953, 4
        %v955 = vadd.f32 %v953, %v954
        %v956 = vrot.slane %v955, 2
        %v957 = vadd.f32 %v955, %v956
        %v958 = vrot.slane %v957, 1
        %v959 = vadd.f32 %v957, %v958
        %v960 = vsel %vm659, %v948, 0.0
        %v961 = vsel %vm659, %v950, 0.0
        %v962 = vadd.f32 %v960, %v961
        %v963 = vrot.slane %v962, 4
        %v964 = vadd.f32 %v962, %v963
        %v965 = vrot.slane %v964, 2
        %v966 = vadd.f32 %v964, %v965
        %v967 = vrot.slane %v966, 1
        %v968 = vadd.f32 %v966, %v967
        %v971 = vcombine.low %v959, %v968
        %v973 = vunpack.c.l.s4 1966171168
        %v974 = vunpack.c.0.s8 %v973
        %v975 = vlaneseq
        %v976 = vshrl.u32 %v975, 7
        %v977 = vsub.s32 %v974, %v976
        %v978 = vrot.slane %v971, %v977
        %v980 = vunpack.c.l.s4 1966171168
        %v981 = vunpack.c.0.s8 %v980
        %v982 = vlaneseq
        %v983 = vshrl.u32 %v982, 7
        %v984 = vsub.s32 %v981, %v983
        %v985 = vrot.slane %v978, %v984
        %v987 = vadd.f32 %v952, %v985
        %988 = vst.msk [vmem:[%s951] ss:$8 sm:$0x3] %vm691, %v987
        %989 = vst.msk [vmem:[%s951] ss:$8 sm:$0x0] %vm691, %v987
        %s990 = scalar_lea.vmem [#allocation2], 5
        %v991 = vld [vmem:[%s990] ss:$8 sm:$0x3]
        %v992 = vadd.f32 %v931, %v933
        %v993 = vrot.slane %v992, 4
        %v994 = vadd.f32 %v992, %v993
        %v995 = vrot.slane %v994, 2
        %v996 = vadd.f32 %v994, %v995
        %v997 = vrot.slane %v996, 1
        %v998 = vadd.f32 %v996, %v997
        %v999 = vsel %vm659, %v932, 0.0
        %v1000 = vsel %vm659, %v934, 0.0
        %v1001 = vadd.f32 %v999, %v1000
        %v1002 = vrot.slane %v1001, 4
        %v1003 = vadd.f32 %v1001, %v1002
        %v1004 = vrot.slane %v1003, 2
        %v1005 = vadd.f32 %v1003, %v1004
        %v1006 = vrot.slane %v1005, 1
        %v1007 = vadd.f32 %v1005, %v1006
        %v1010 = vcombine.low %v998, %v1007
        %v1012 = vunpack.c.l.s4 1966171168
        %v1013 = vunpack.c.0.s8 %v1012
        %v1014 = vlaneseq
        %v1015 = vshrl.u32 %v1014, 7
        %v1016 = vsub.s32 %v1013, %v1015
        %v1017 = vrot.slane %v1010, %v1016
        %v1019 = vunpack.c.l.s4 1966171168
        %v1020 = vunpack.c.0.s8 %v1019
        %v1021 = vlaneseq
        %v1022 = vshrl.u32 %v1021, 7
        %v1023 = vsub.s32 %v1020, %v1022
        %v1024 = vrot.slane %v1017, %v1023
        %v1026 = vadd.f32 %v991, %v1024
        %1027 = vst.msk [vmem:[%s990] ss:$8 sm:$0x3] %vm691, %v1026
        %1028 = vst.msk [vmem:[%s990] ss:$8 sm:$0x0] %vm691, %v1026
        %v1029 = vmul.f32 %v919, %v943
        %v1030 = vmul.f32 %v920, %v944
        %v1031 = vmul.f32 %v921, %v945
        %v1032 = vmul.f32 %v922, %v946
        %s1033 = scalar_lea.vmem [#allocation2], 6
        %v1034 = vld [vmem:[%s1033] ss:$8 sm:$0x3]
        %v1035 = vadd.f32 %v1029, %v1031
        %v1036 = vrot.slane %v1035, 4
        %v1037 = vadd.f32 %v1035, %v1036
        %v1038 = vrot.slane %v1037, 2
        %v1039 = vadd.f32 %v1037, %v1038
        %v1040 = vrot.slane %v1039, 1
        %v1041 = vadd.f32 %v1039, %v1040
        %v1042 = vsel %vm659, %v1030, 0.0
        %v1043 = vsel %vm659, %v1032, 0.0
        %v1044 = vadd.f32 %v1042, %v1043
        %v1045 = vrot.slane %v1044, 4
        %v1046 = vadd.f32 %v1044, %v1045
        %v1047 = vrot.slane %v1046, 2
        %v1048 = vadd.f32 %v1046, %v1047
        %v1049 = vrot.slane %v1048, 1
        %v1050 = vadd.f32 %v1048, %v1049
        %v1053 = vcombine.low %v1041, %v1050
        %v1055 = vunpack.c.l.s4 1966171168
        %v1056 = vunpack.c.0.s8 %v1055
        %v1057 = vlaneseq
        %v1058 = vshrl.u32 %v1057, 7
        %v1059 = vsub.s32 %v1056, %v1058
        %v1060 = vrot.slane %v1053, %v1059
        %v1062 = vunpack.c.l.s4 1966171168
        %v1063 = vunpack.c.0.s8 %v1062
        %v1064 = vlaneseq
        %v1065 = vshrl.u32 %v1064, 7
        %v1066 = vsub.s32 %v1063, %v1065
        %v1067 = vrot.slane %v1060, %v1066
        %v1069 = vadd.f32 %v1034, %v1067
        %1070 = vst.msk [vmem:[%s1033] ss:$8 sm:$0x3] %vm691, %v1069
        %1071 = vst.msk [vmem:[%s1033] ss:$8 sm:$0x0] %vm691, %v1069
        %s1072 = scalar_lea.vmem [#allocation2], 7
        %v1073 = vld [vmem:[%s1072] ss:$8 sm:$0x3]
        %v1074 = vadd.f32 %v943, %v945
        %v1075 = vrot.slane %v1074, 4
        %v1076 = vadd.f32 %v1074, %v1075
        %v1077 = vrot.slane %v1076, 2
        %v1078 = vadd.f32 %v1076, %v1077
        %v1079 = vrot.slane %v1078, 1
        %v1080 = vadd.f32 %v1078, %v1079
        %v1081 = vsel %vm659, %v944, 0.0
        %v1082 = vsel %vm659, %v946, 0.0
        %v1083 = vadd.f32 %v1081, %v1082
        %v1084 = vrot.slane %v1083, 4
        %v1085 = vadd.f32 %v1083, %v1084
        %v1086 = vrot.slane %v1085, 2
        %v1087 = vadd.f32 %v1085, %v1086
        %v1088 = vrot.slane %v1087, 1
        %v1089 = vadd.f32 %v1087, %v1088
        %v1092 = vcombine.low %v1080, %v1089
        %v1094 = vunpack.c.l.s4 1966171168
        %v1095 = vunpack.c.0.s8 %v1094
        %v1096 = vlaneseq
        %v1097 = vshrl.u32 %v1096, 7
        %v1098 = vsub.s32 %v1095, %v1097
        %v1099 = vrot.slane %v1092, %v1098
        %v1101 = vunpack.c.l.s4 1966171168
        %v1102 = vunpack.c.0.s8 %v1101
        %v1103 = vlaneseq
        %v1104 = vshrl.u32 %v1103, 7
        %v1105 = vsub.s32 %v1102, %v1104
        %v1106 = vrot.slane %v1099, %v1105
        %v1108 = vadd.f32 %v1073, %v1106
        %1109 = vst.msk [vmem:[%s1072] ss:$8 sm:$0x3] %vm691, %v1108
        %1110 = vst.msk [vmem:[%s1072] ss:$8 sm:$0x0] %vm691, %v1108
        %v1111 = vsub.f32 %v615, %v623
        %v1112 = vsub.f32 %v616, %v624
        %v1113 = vsub.f32 %v617, %v625
        %v1114 = vsub.f32 %v618, %v626
        %v1115 = vand.u32 2147483647, %v1111
        %v1116 = vand.u32 2147483647, %v1112
        %v1117 = vand.u32 2147483647, %v1113
        %v1118 = vand.u32 2147483647, %v1114
        %v1119 = vsub.f32 %v619, %v627
        %v1120 = vsub.f32 %v620, %v628
        %v1121 = vsub.f32 %v621, %v629
        %v1122 = vsub.f32 %v622, %v630
        %v1123 = vand.u32 2147483647, %v1119
        %v1124 = vand.u32 2147483647, %v1120
        %v1125 = vand.u32 2147483647, %v1121
        %v1126 = vand.u32 2147483647, %v1122
        %v1127 = vadd.f32 %v1115, %v1123
        %v1128 = vadd.f32 %v1116, %v1124
        %v1129 = vadd.f32 %v1117, %v1125
        %v1130 = vadd.f32 %v1118, %v1126
        %v1131 = vmul.f32 %v1127, %v643
        %v1132 = vmul.f32 %v1128, %v644
        %v1133 = vmul.f32 %v1129, %v645
        %v1134 = vmul.f32 %v1130, %v646
        %s1135 = scalar_lea.vmem [#allocation2], 16
        %v1136 = vld [vmem:[%s1135] ss:$8 sm:$0x3]
        %v1137 = vadd.f32 %v1131, %v1133
        %v1138 = vrot.slane %v1137, 4
        %v1139 = vadd.f32 %v1137, %v1138
        %v1140 = vrot.slane %v1139, 2
        %v1141 = vadd.f32 %v1139, %v1140
        %v1142 = vrot.slane %v1141, 1
        %v1143 = vadd.f32 %v1141, %v1142
        %v1144 = vsel %vm659, %v1132, 0.0
        %v1145 = vsel %vm659, %v1134, 0.0
        %v1146 = vadd.f32 %v1144, %v1145
        %v1147 = vrot.slane %v1146, 4
        %v1148 = vadd.f32 %v1146, %v1147
        %v1149 = vrot.slane %v1148, 2
        %v1150 = vadd.f32 %v1148, %v1149
        %v1151 = vrot.slane %v1150, 1
        %v1152 = vadd.f32 %v1150, %v1151
        %v1155 = vcombine.low %v1143, %v1152
        %v1157 = vunpack.c.l.s4 1966171168
        %v1158 = vunpack.c.0.s8 %v1157
        %v1159 = vlaneseq
        %v1160 = vshrl.u32 %v1159, 7
        %v1161 = vsub.s32 %v1158, %v1160
        %v1162 = vrot.slane %v1155, %v1161
        %v1164 = vunpack.c.l.s4 1966171168
        %v1165 = vunpack.c.0.s8 %v1164
        %v1166 = vlaneseq
        %v1167 = vshrl.u32 %v1166, 7
        %v1168 = vsub.s32 %v1165, %v1167
        %v1169 = vrot.slane %v1162, %v1168
        %v1171 = vadd.f32 %v1136, %v1169
        %1172 = vst.msk [vmem:[%s1135] ss:$8 sm:$0x3] %vm691, %v1171
        %1173 = vst.msk [vmem:[%s1135] ss:$8 sm:$0x0] %vm691, %v1171
        %s1174 = scalar_lea.vmem [#allocation2], 17
        %v1175 = vld [vmem:[%s1174] ss:$8 sm:$0x3]
        %v1176 = vadd.f32 %v643, %v645
        %v1177 = vrot.slane %v1176, 4
        %v1178 = vadd.f32 %v1176, %v1177
        %v1179 = vrot.slane %v1178, 2
        %v1180 = vadd.f32 %v1178, %v1179
        %v1181 = vrot.slane %v1180, 1
        %v1182 = vadd.f32 %v1180, %v1181
        %v1183 = vsel %vm659, %v644, 0.0
        %v1184 = vsel %vm659, %v646, 0.0
        %v1185 = vadd.f32 %v1183, %v1184
        %v1186 = vrot.slane %v1185, 4
        %v1187 = vadd.f32 %v1185, %v1186
        %v1188 = vrot.slane %v1187, 2
        %v1189 = vadd.f32 %v1187, %v1188
        %v1190 = vrot.slane %v1189, 1
        %v1191 = vadd.f32 %v1189, %v1190
        %v1194 = vcombine.low %v1182, %v1191
        %v1196 = vunpack.c.l.s4 1966171168
        %v1197 = vunpack.c.0.s8 %v1196
        %v1198 = vlaneseq
        %v1199 = vshrl.u32 %v1198, 7
        %v1200 = vsub.s32 %v1197, %v1199
        %v1201 = vrot.slane %v1194, %v1200
        %v1203 = vunpack.c.l.s4 1966171168
        %v1204 = vunpack.c.0.s8 %v1203
        %v1205 = vlaneseq
        %v1206 = vshrl.u32 %v1205, 7
        %v1207 = vsub.s32 %v1204, %v1206
        %v1208 = vrot.slane %v1201, %v1207
        %v1210 = vadd.f32 %v1175, %v1208
        %1211 = vst.msk [vmem:[%s1174] ss:$8 sm:$0x3] %vm691, %v1210
        %1212 = vst.msk [vmem:[%s1174] ss:$8 sm:$0x0] %vm691, %v1210
        // Predicated region
        $region81: #{tpu_custom_call.1} parent=47 // pred_check
          %p1213 = pneg %p582
        $region82: #{tpu_custom_call.1} parent=47 // pred_check_branch
          %1215 = sbr.rel (%p1213) target = $region84
        $region83: #{tpu_custom_call.1} parent=47 // pred_region
          %v1216 = vld [vmem:[#allocation2] sm:$0xff]
          %v1217 = vld [vmem:[#allocation2 + $0x8] sm:$0xff]
          %v1218 = vld [vmem:[#allocation2 + $0x10] sm:$0xff]
          %v1219 = vld [vmem:[#allocation2 + $0x18] sm:$0xff]
          %v1220 = vsel %vm659, %v1217, 0.0
          %v1221 = vadd.f32 %v1216, %v1220
          %1222 = vadd.xlane.f32.xlu0 %v1221
          %v1223 = vpop.xlane.xlu0 %1222
          %v1224 = vsel %vm659, %v1219, 0.0
          %v1225 = vadd.f32 %v1218, %v1224
          %1226 = vadd.xlane.f32.xlu0 %v1225
          %v1227 = vpop.xlane.xlu0 %1226
          %1228 = vst [vmem:[%s574] sm:$0xff] %v1223
          %1229 = vst [vmem:[%s574 + $0x8] sm:$0xff] %v1227
        $region84: #{tpu_custom_call.1} parent=47 // pred_fallthru
          _
        %s1230 = sand.u32 %s249, 1
        %s1231 = scalar_lea.sflag [#allocation5], %s1230
        %s1232 = sand.u32 %s249, 1
        %s1233 = smul.addr %s1232, 16
        %s1234 = scalar_lea.vmem [#allocation15], %s1233
        // Predicated region
        $region85: #{tpu_custom_call.1} parent=47 // pred_check
          %p1235 = pneg %p259
        $region86: #{tpu_custom_call.1} parent=47 // pred_check_branch
          %1237 = sbr.rel (%p1235) target = $region88
        $region87: #{tpu_custom_call.1} parent=47 // pred_region
          %s1239 = ssub.s32 256, 256
          %1240 = vsyncadd %s1231, %s1239
          %s1241 = smul.addr %s37, 2
          %s1242 = smul.addr %s1241, 128
          %s1243 = scalar_lea.hbm %s7, %s1242
          %s1244 = sshll.u32 %s1234, 4
          %s1245 = int_to_ptr.vmem [resolvable:$true] %s1244
          %1250 = dma.vmem_to_hbm [thread:$0]  %s1245, 256, %s1243, %s1231, 128, 128, 8
        $region88: #{tpu_custom_call.1} parent=47 // pred_fallthru
          _
      $region48: #{tpu_custom_call.1} parent=5 // pred_fallthru
        _
      %p1251 = scmp.le.s32.totalorder 2, %s28
      // Predicated region
      $region89: #{tpu_custom_call.1} parent=5 // pred_check
        %p1252 = pneg %p1251
      $region90: #{tpu_custom_call.1} parent=5 // pred_check_branch
        %1254 = sbr.rel (%p1252) target = $region92
      $region91: #{tpu_custom_call.1} parent=5 // pred_region
        %s1255 = ssub.s32 %s28, 2
        // Predicated region
        $region93: #{tpu_custom_call.1} parent=91 // pred_check
          %p1256 = pneg %p265
        $region94: #{tpu_custom_call.1} parent=91 // pred_check_branch
          %1258 = sbr.rel (%p1256) target = $region96
        $region95: #{tpu_custom_call.1} parent=91 // pred_region
          %s1259 = sand.u32 %s250, 1
          %s1260 = scalar_lea.sflag [#allocation5], %s1259
          %s1261 = sand.u32 %s250, 1
          %s1262 = smul.addr %s1261, 16
          %s1263 = scalar_lea.vmem [#allocation15], %s1262
          %1264 = dma.done %s1260, 256
        $region96: #{tpu_custom_call.1} parent=91 // pred_fallthru
          _
      $region92: #{tpu_custom_call.1} parent=5 // pred_fallthru
        _
    $region6: #{tpu_custom_call.1} parent=1 // loop_footer
      %s32 = sadd.s32 1, %s28
    $region7: #{tpu_custom_call.1} parent=1 // loop_footer_branch
      %27 = sbr.rel target = $region3
    $region8: #{tpu_custom_call.1} parent=1 // loop_exit
      _
    %1265 = vsyncpa [#allocation4], 1
    %s1266 = scalar_lea.sflag [#allocation4], 1
    %1267 = vsyncpa %s1266, 1
    %1268 = vsyncpa [#allocation7], 1
    %s1269 = scalar_lea.sflag [#allocation7], 1
    %1270 = vsyncpa %s1269, 1
    %1271 = vsyncpa [#allocation10], 1
    %s1272 = scalar_lea.sflag [#allocation10], 1
    %1273 = vsyncpa %s1272, 1
    %1274 = vsyncpa [#allocation13], 1
    %s1275 = scalar_lea.sflag [#allocation13], 1
    %1276 = vsyncpa %s1275, 1
    %1277 = vsyncpa [#allocation5], 1
    %s1278 = scalar_lea.sflag [#allocation5], 1
    %1279 = vsyncpa %s1278, 1

</llo_original>
